<compile_context>
chip_gen: v6e
topology: v6e:2x2x1
jax: 0.10.0
libtpu: 0.0.40
codegen_flags: <defaults>
</compile_context>

<pallas_src>
import functools

import jax
import jax.numpy as jnp
from jax.experimental import pallas as pl
from jax.experimental.pallas import tpu as pltpu


def _fused_conv_bn_elu_pool_kernel(x_ref, w_ref, scale_ref, shift_ref, o_ref, pm_ref, *,
                                   tap_offsets, cin, lv, wp, p, pk, lw, lh, ld):
    """One grid step == (one batch element, one pooled-depth block).

    x_ref    : (Cin, span*P) f32  padded raw-input slab for this depth block (P = Hp*Wp)
    w_ref    : (Cout, K)     f32  conv weights, K = ks^3*Cin (tap-major, channel-minor)
    scale_ref: (Cout, 1)     f32  BN scale = gamma / sqrt(var + eps)
    shift_ref: (Cout, 1)     f32  conv bias + BN shift, pre-folded
    o_ref    : (Cout, Ld)    f32  3x3x3-window-maxed slab (stride-2 anchors picked in wrapper)
    pm_ref   : (K, LV)       f32  VMEM scratch: im2col patch matrix built in-kernel
    """
    # ---- in-kernel im2col: K x LV patch matrix from ks^3 static tap-offset slices ----
    for t, off in enumerate(tap_offsets):
        pm_ref[t * cin:(t + 1) * cin, :] = x_ref[:, off:off + lv]

    # ---- Conv3d as ONE lane-dense matmul (MXU), f32 accumulation ----
    acc = jnp.dot(w_ref[...], pm_ref[...], preferred_element_type=jnp.float32)  # (Cout, LV)

    # ---- BatchNorm affine (+ conv bias) and ELU(alpha=1); f32 epilogue ----
    y = acc * scale_ref[...] + shift_ref[...]
    # clamp before exp so the dead branch cannot overflow on garbage lanes
    y = jnp.where(y > 0.0, y, jnp.exp(jnp.minimum(y, 0.0)) - 1.0)

    # ---- separable 3x3x3 max pool on the flat padded-plane layout ----
    # lane index q = local_plane*P + h*Wp + w ; windows never touch wrapped garbage
    # at the anchors the wrapper extracts.
    m = y[:, 0:lw]
    for dw in range(1, pk):
        m = jnp.maximum(m, y[:, dw:dw + lw])
    m2 = m[:, 0:lh]
    for dh in range(1, pk):
        m2 = jnp.maximum(m2, m[:, dh * wp:dh * wp + lh])
    m3 = m2[:, 0:ld]
    for dd in range(1, pk):
        m3 = jnp.maximum(m3, m2[:, dd * p:dd * p + ld])

    o_ref[...] = m3  # one lane-dense store per step


def conv_block_forward(x, conv_w, conv_b, gamma, beta, run_mean, run_var,
                       *, conv_stride=1, conv_pad=1,
                       pool_ks=3, pool_stride=2, eps=1e-5):
    """Inference forward of ConvBlock. x: (N, Cin, D, H, W) -> (N, Cout, OD, OH, OW)."""
    N, Cin, D, H, W = x.shape
    Cout, Cin_w, ks, _, _ = conv_w.shape
    assert Cin_w == Cin
    assert conv_stride == 1, "flat-lane conv formulation assumes stride 1"

    Dp, Hp, Wp = D + 2 * conv_pad, H + 2 * conv_pad, W + 2 * conv_pad
    Do, Ho, Wo = Dp - ks + 1, Hp - ks + 1, Wp - ks + 1
    pk, ps = pool_ks, pool_stride
    OD = (Do - pk) // ps + 1
    OH = (Ho - pk) // ps + 1
    OW = (Wo - pk) // ps + 1
    assert OD >= 1 and OH >= 1 and OW >= 1

    P = Hp * Wp                     # flat padded-plane size (lane layout row stride = Wp)
    K = Cin * ks ** 3
    span = pk + ks - 1              # padded-input depth planes needed per pooled plane

    # ---- padded raw input, blocked by pooled depth plane (tiny 1-plane halo dup) ----
    xp = jnp.pad(x, ((0, 0), (0, 0),
                     (conv_pad, conv_pad), (conv_pad, conv_pad), (conv_pad, conv_pad)))
    xp = xp.reshape(N, Cin, Dp, P).astype(jnp.float32)
    plane_idx = ps * jnp.arange(OD)[:, None] + jnp.arange(span)[None, :]   # (OD, span)
    xblk = xp[:, :, plane_idx, :]                                          # (N, Cin, OD, span, P)
    xblk = xblk.transpose(0, 2, 1, 3, 4).reshape(N, OD, Cin, span * P)

    # ---- weights in tap-major / channel-minor K order to match in-kernel patch build ----
    w2d = conv_w.transpose(0, 2, 3, 4, 1).reshape(Cout, K).astype(jnp.float32)
    bn_scale = (gamma / jnp.sqrt(run_var + eps)).astype(jnp.float32)            # (Cout,)
    scale = bn_scale.reshape(Cout, 1)
    shift = ((conv_b - run_mean) * bn_scale + beta).reshape(Cout, 1).astype(jnp.float32)

    # ---- static geometry for the kernel ----
    LV = span * P - (ks - 1) * (P + Wp + 1)        # valid flat conv-output width per block
    Lw = LV - (pk - 1)
    Lh = Lw - (pk - 1) * Wp
    Ld = Lh - (pk - 1) * P
    tap_offsets = tuple(kd * P + kh * Wp + kw
                        for kd in range(ks) for kh in range(ks) for kw in range(ks))

    kernel = functools.partial(
        _fused_conv_bn_elu_pool_kernel,
        tap_offsets=tap_offsets, cin=Cin, lv=LV, wp=Wp, p=P, pk=pk, lw=Lw, lh=Lh, ld=Ld)

    flops = 2 * N * OD * Cout * K * LV
    bytes_accessed = int(xblk.size * 4 + w2d.size * 4 + 2 * Cout * 4 + N * OD * Cout * Ld * 4)

    slab = pl.pallas_call(
        kernel,
        out_shape=jax.ShapeDtypeStruct((N, OD, Cout, Ld), jnp.float32),
        grid=(N, OD),
        in_specs=[
            pl.BlockSpec((None, None, Cin, span * P), lambda n, j: (n, j, 0, 0)),  # pipelined
            pl.BlockSpec((Cout, K), lambda n, j: (0, 0)),                          # resident
            pl.BlockSpec((Cout, 1), lambda n, j: (0, 0)),                          # resident
            pl.BlockSpec((Cout, 1), lambda n, j: (0, 0)),                          # resident
        ],
        out_specs=pl.BlockSpec((None, None, Cout, Ld), lambda n, j: (n, j, 0, 0)),
        scratch_shapes=[pltpu.VMEM((K, LV), jnp.float32)],
        compiler_params=pltpu.CompilerParams(
            dimension_semantics=("parallel", "arbitrary"),   # batch across TCs, depth pipelined
            vmem_limit_bytes=32 * 1024 * 1024),              # safe on v5e/v6e/v7x at these blocks
        cost_estimate=pl.CostEstimate(
            flops=flops,
            transcendentals=N * OD * Cout * LV,
            bytes_accessed=bytes_accessed),
    )(xblk, w2d, scale, shift)

    # ---- stride-ps pooling-anchor extraction on the tiny pooled slab (wrapper glue) ----
    anchors = (ps * jnp.arange(OH)[:, None] * Wp + ps * jnp.arange(OW)[None, :]).reshape(-1)
    out = jnp.take(slab, anchors, axis=3)                    # (N, OD, Cout, OH*OW)
    out = out.reshape(N, OD, Cout, OH, OW).transpose(0, 2, 1, 3, 4)
    return out


if __name__ == "__main__":
    # Small shapes consistent with the module: N=2, C_in=4, C_out=8, spatial 8^3, ks=3.
    N, Cin, Cout, S, ks = 2, 4, 8, 8, 3
    key = jax.random.PRNGKey(0)
    k_x, k_w, k_b = jax.random.split(key, 3)

    x = jax.random.normal(k_x, (N, Cin, S, S, S), dtype=jnp.float32)

    # Deterministic parameter init (shapes from the module's __init__).
    fan_in = Cin * ks ** 3
    bound = 1.0 / (fan_in ** 0.5)
    conv_w = jax.random.uniform(k_w, (Cout, Cin, ks, ks, ks),
                                dtype=jnp.float32, minval=-bound, maxval=bound)
    conv_b = jax.random.uniform(k_b, (Cout,), dtype=jnp.float32,
                                minval=-bound, maxval=bound)
    gamma = jnp.ones((Cout,), jnp.float32)      # BatchNorm3d default weight
    beta = jnp.zeros((Cout,), jnp.float32)      # BatchNorm3d default bias
    run_mean = jnp.zeros((Cout,), jnp.float32)  # default running_mean
    run_var = jnp.ones((Cout,), jnp.float32)    # default running_var

    fwd = jax.jit(conv_block_forward)
    out = jax.block_until_ready(fwd(x, conv_w, conv_b, gamma, beta, run_mean, run_var))

    # Conv (pad=1, stride=1) keeps 8^3; MaxPool3d(3, stride=2): (8-3)//2+1 = 3.
    assert out.shape == (N, Cout, 3, 3, 3), out.shape
    assert out.dtype == jnp.float32
    assert bool(jnp.isfinite(out).all())
    print("KERNEL_OK")
</pallas_src>

<mosaic_0001>
module attributes {stable_mosaic.version = 11 : i64} {
  func.func @_fused_conv_bn_elu_pool_kernel(%arg0: i32, %arg1: i32, %arg2: memref<1x1x4x500xf32, #tpu.memory_space<vmem>>, %arg3: memref<8x108xf32, #tpu.memory_space<vmem>>, %arg4: memref<8x1xf32, #tpu.memory_space<vmem>>, %arg5: memref<8x1xf32, #tpu.memory_space<vmem>>, %arg6: memref<1x1x8x56xf32, #tpu.memory_space<vmem>>, %arg7: memref<108x278xf32, #tpu.memory_space<vmem>>) attributes {dimension_semantics = [#tpu.dimension_semantics<parallel>, #tpu.dimension_semantics<arbitrary>], iteration_bounds = array<i64: 2, 3>, scalar_prefetch = 0 : i64, scratch_operands = 1 : i64, tpu.core_type = #tpu.core_type<tc>, window_params = [{transform_indices = @transform_0, window_bounds = array<i64: 1, 1, 4, 500>}, {pipeline_mode = #tpu.pipeline_mode<synchronous>, transform_indices = @transform_1, window_bounds = array<i64: 8, 108>}, {pipeline_mode = #tpu.pipeline_mode<synchronous>, transform_indices = @transform_2, window_bounds = array<i64: 8, 1>}, {pipeline_mode = #tpu.pipeline_mode<synchronous>, transform_indices = @transform_3, window_bounds = array<i64: 8, 1>}, {transform_indices = @transform_4, window_bounds = array<i64: 1, 1, 8, 56>}]} {
    %c0 = arith.constant 0 : index
    %c0_0 = arith.constant 0 : index
    %c0_1 = arith.constant 0 : index
    %c0_2 = arith.constant 0 : index
    %0 = vector.load %arg2[%c0, %c0_0, %c0_1, %c0_2] : memref<1x1x4x500xf32, #tpu.memory_space<vmem>>, vector<1x1x4x278xf32>
    %1 = vector.shape_cast %0 : vector<1x1x4x278xf32> to vector<4x278xf32>
    %c0_3 = arith.constant 0 : index
    %c0_4 = arith.constant 0 : index
    %2 = vector.load %arg7[%c0_3, %c0_4] : memref<108x278xf32, #tpu.memory_space<vmem>>, vector<4x278xf32>
    tpu.vector_store %arg7[%c0_3, %c0_4], %1 {strides = array<i32>} : memref<108x278xf32, #tpu.memory_space<vmem>>, vector<4x278xf32>,
    %c0_5 = arith.constant 0 : index
    %c0_6 = arith.constant 0 : index
    %c0_7 = arith.constant 0 : index
    %c1 = arith.constant 1 : index
    %3 = vector.load %arg2[%c0_5, %c0_6, %c0_7, %c1] : memref<1x1x4x500xf32, #tpu.memory_space<vmem>>, vector<1x1x4x278xf32>
    %4 = vector.shape_cast %3 : vector<1x1x4x278xf32> to vector<4x278xf32>
    %c4 = arith.constant 4 : index
    %c0_8 = arith.constant 0 : index
    %5 = vector.load %arg7[%c4, %c0_8] : memref<108x278xf32, #tpu.memory_space<vmem>>, vector<4x278xf32>
    tpu.vector_store %arg7[%c4, %c0_8], %4 {strides = array<i32>} : memref<108x278xf32, #tpu.memory_space<vmem>>, vector<4x278xf32>,
    %c0_9 = arith.constant 0 : index
    %c0_10 = arith.constant 0 : index
    %c0_11 = arith.constant 0 : index
    %c2 = arith.constant 2 : index
    %6 = vector.load %arg2[%c0_9, %c0_10, %c0_11, %c2] : memref<1x1x4x500xf32, #tpu.memory_space<vmem>>, vector<1x1x4x278xf32>
    %7 = vector.shape_cast %6 : vector<1x1x4x278xf32> to vector<4x278xf32>
    %c8 = arith.constant 8 : index
    %c0_12 = arith.constant 0 : index
    %8 = vector.load %arg7[%c8, %c0_12] : memref<108x278xf32, #tpu.memory_space<vmem>>, vector<4x278xf32>
    tpu.vector_store %arg7[%c8, %c0_12], %7 {strides = array<i32>} : memref<108x278xf32, #tpu.memory_space<vmem>>, vector<4x278xf32>,
    %c0_13 = arith.constant 0 : index
    %c0_14 = arith.constant 0 : index
    %c0_15 = arith.constant 0 : index
    %c10 = arith.constant 10 : index
    %9 = vector.load %arg2[%c0_13, %c0_14, %c0_15, %c10] : memref<1x1x4x500xf32, #tpu.memory_space<vmem>>, vector<1x1x4x278xf32>
    %10 = vector.shape_cast %9 : vector<1x1x4x278xf32> to vector<4x278xf32>
    %c12 = arith.constant 12 : index
    %c0_16 = arith.constant 0 : index
    %11 = vector.load %arg7[%c12, %c0_16] : memref<108x278xf32, #tpu.memory_space<vmem>>, vector<4x278xf32>
    tpu.vector_store %arg7[%c12, %c0_16], %10 {strides = array<i32>} : memref<108x278xf32, #tpu.memory_space<vmem>>, vector<4x278xf32>,
    %c0_17 = arith.constant 0 : index
    %c0_18 = arith.constant 0 : index
    %c0_19 = arith.constant 0 : index
    %c11 = arith.constant 11 : index
    %12 = vector.load %arg2[%c0_17, %c0_18, %c0_19, %c11] : memref<1x1x4x500xf32, #tpu.memory_space<vmem>>, vector<1x1x4x278xf32>
    %13 = vector.shape_cast %12 : vector<1x1x4x278xf32> to vector<4x278xf32>
    %c16 = arith.constant 16 : index
    %c0_20 = arith.constant 0 : index
    %14 = vector.load %arg7[%c16, %c0_20] : memref<108x278xf32, #tpu.memory_space<vmem>>, vector<4x278xf32>
    tpu.vector_store %arg7[%c16, %c0_20], %13 {strides = array<i32>} : memref<108x278xf32, #tpu.memory_space<vmem>>, vector<4x278xf32>,
    %c0_21 = arith.constant 0 : index
    %c0_22 = arith.constant 0 : index
    %c0_23 = arith.constant 0 : index
    %c12_24 = arith.constant 12 : index
    %15 = vector.load %arg2[%c0_21, %c0_22, %c0_23, %c12_24] : memref<1x1x4x500xf32, #tpu.memory_space<vmem>>, vector<1x1x4x278xf32>
    %16 = vector.shape_cast %15 : vector<1x1x4x278xf32> to vector<4x278xf32>
    %c20 = arith.constant 20 : index
    %c0_25 = arith.constant 0 : index
    %17 = vector.load %arg7[%c20, %c0_25] : memref<108x278xf32, #tpu.memory_space<vmem>>, vector<4x278xf32>
    tpu.vector_store %arg7[%c20, %c0_25], %16 {strides = array<i32>} : memref<108x278xf32, #tpu.memory_space<vmem>>, vector<4x278xf32>,
    %c0_26 = arith.constant 0 : index
    %c0_27 = arith.constant 0 : index
    %c0_28 = arith.constant 0 : index
    %c20_29 = arith.constant 20 : index
    %18 = vector.load %arg2[%c0_26, %c0_27, %c0_28, %c20_29] : memref<1x1x4x500xf32, #tpu.memory_space<vmem>>, vector<1x1x4x278xf32>
    %19 = vector.shape_cast %18 : vector<1x1x4x278xf32> to vector<4x278xf32>
    %c24 = arith.constant 24 : index
    %c0_30 = arith.constant 0 : index
    %20 = vector.load %arg7[%c24, %c0_30] : memref<108x278xf32, #tpu.memory_space<vmem>>, vector<4x278xf32>
    tpu.vector_store %arg7[%c24, %c0_30], %19 {strides = array<i32>} : memref<108x278xf32, #tpu.memory_space<vmem>>, vector<4x278xf32>,
    %c0_31 = arith.constant 0 : index
    %c0_32 = arith.constant 0 : index
    %c0_33 = arith.constant 0 : index
    %c21 = arith.constant 21 : index
    %21 = vector.load %arg2[%c0_31, %c0_32, %c0_33, %c21] : memref<1x1x4x500xf32, #tpu.memory_space<vmem>>, vector<1x1x4x278xf32>
    %22 = vector.shape_cast %21 : vector<1x1x4x278xf32> to vector<4x278xf32>
    %c28 = arith.constant 28 : index
    %c0_34 = arith.constant 0 : index
    %23 = vector.load %arg7[%c28, %c0_34] : memref<108x278xf32, #tpu.memory_space<vmem>>, vector<4x278xf32>
    tpu.vector_store %arg7[%c28, %c0_34], %22 {strides = array<i32>} : memref<108x278xf32, #tpu.memory_space<vmem>>, vector<4x278xf32>,
    %c0_35 = arith.constant 0 : index
    %c0_36 = arith.constant 0 : index
    %c0_37 = arith.constant 0 : index
    %c22 = arith.constant 22 : index
    %24 = vector.load %arg2[%c0_35, %c0_36, %c0_37, %c22] : memref<1x1x4x500xf32, #tpu.memory_space<vmem>>, vector<1x1x4x278xf32>
    %25 = vector.shape_cast %24 : vector<1x1x4x278xf32> to vector<4x278xf32>
    %c32 = arith.constant 32 : index
    %c0_38 = arith.constant 0 : index
    %26 = vector.load %arg7[%c32, %c0_38] : memref<108x278xf32, #tpu.memory_space<vmem>>, vector<4x278xf32>
    tpu.vector_store %arg7[%c32, %c0_38], %25 {strides = array<i32>} : memref<108x278xf32, #tpu.memory_space<vmem>>, vector<4x278xf32>,
    %c0_39 = arith.constant 0 : index
    %c0_40 = arith.constant 0 : index
    %c0_41 = arith.constant 0 : index
    %c100 = arith.constant 100 : index
    %27 = vector.load %arg2[%c0_39, %c0_40, %c0_41, %c100] : memref<1x1x4x500xf32, #tpu.memory_space<vmem>>, vector<1x1x4x278xf32>
    %28 = vector.shape_cast %27 : vector<1x1x4x278xf32> to vector<4x278xf32>
    %c36 = arith.constant 36 : index
    %c0_42 = arith.constant 0 : index
    %29 = vector.load %arg7[%c36, %c0_42] : memref<108x278xf32, #tpu.memory_space<vmem>>, vector<4x278xf32>
    tpu.vector_store %arg7[%c36, %c0_42], %28 {strides = array<i32>} : memref<108x278xf32, #tpu.memory_space<vmem>>, vector<4x278xf32>,
    %c0_43 = arith.constant 0 : index
    %c0_44 = arith.constant 0 : index
    %c0_45 = arith.constant 0 : index
    %c101 = arith.constant 101 : index
    %30 = vector.load %arg2[%c0_43, %c0_44, %c0_45, %c101] : memref<1x1x4x500xf32, #tpu.memory_space<vmem>>, vector<1x1x4x278xf32>
    %31 = vector.shape_cast %30 : vector<1x1x4x278xf32> to vector<4x278xf32>
    %c40 = arith.constant 40 : index
    %c0_46 = arith.constant 0 : index
    %32 = vector.load %arg7[%c40, %c0_46] : memref<108x278xf32, #tpu.memory_space<vmem>>, vector<4x278xf32>
    tpu.vector_store %arg7[%c40, %c0_46], %31 {strides = array<i32>} : memref<108x278xf32, #tpu.memory_space<vmem>>, vector<4x278xf32>,
    %c0_47 = arith.constant 0 : index
    %c0_48 = arith.constant 0 : index
    %c0_49 = arith.constant 0 : index
    %c102 = arith.constant 102 : index
    %33 = vector.load %arg2[%c0_47, %c0_48, %c0_49, %c102] : memref<1x1x4x500xf32, #tpu.memory_space<vmem>>, vector<1x1x4x278xf32>
    %34 = vector.shape_cast %33 : vector<1x1x4x278xf32> to vector<4x278xf32>
    %c44 = arith.constant 44 : index
    %c0_50 = arith.constant 0 : index
    %35 = vector.load %arg7[%c44, %c0_50] : memref<108x278xf32, #tpu.memory_space<vmem>>, vector<4x278xf32>
    tpu.vector_store %arg7[%c44, %c0_50], %34 {strides = array<i32>} : memref<108x278xf32, #tpu.memory_space<vmem>>, vector<4x278xf32>,
    %c0_51 = arith.constant 0 : index
    %c0_52 = arith.constant 0 : index
    %c0_53 = arith.constant 0 : index
    %c110 = arith.constant 110 : index
    %36 = vector.load %arg2[%c0_51, %c0_52, %c0_53, %c110] : memref<1x1x4x500xf32, #tpu.memory_space<vmem>>, vector<1x1x4x278xf32>
    %37 = vector.shape_cast %36 : vector<1x1x4x278xf32> to vector<4x278xf32>
    %c48 = arith.constant 48 : index
    %c0_54 = arith.constant 0 : index
    %38 = vector.load %arg7[%c48, %c0_54] : memref<108x278xf32, #tpu.memory_space<vmem>>, vector<4x278xf32>
    tpu.vector_store %arg7[%c48, %c0_54], %37 {strides = array<i32>} : memref<108x278xf32, #tpu.memory_space<vmem>>, vector<4x278xf32>,
    %c0_55 = arith.constant 0 : index
    %c0_56 = arith.constant 0 : index
    %c0_57 = arith.constant 0 : index
    %c111 = arith.constant 111 : index
    %39 = vector.load %arg2[%c0_55, %c0_56, %c0_57, %c111] : memref<1x1x4x500xf32, #tpu.memory_space<vmem>>, vector<1x1x4x278xf32>
    %40 = vector.shape_cast %39 : vector<1x1x4x278xf32> to vector<4x278xf32>
    %c52 = arith.constant 52 : index
    %c0_58 = arith.constant 0 : index
    %41 = vector.load %arg7[%c52, %c0_58] : memref<108x278xf32, #tpu.memory_space<vmem>>, vector<4x278xf32>
    tpu.vector_store %arg7[%c52, %c0_58], %40 {strides = array<i32>} : memref<108x278xf32, #tpu.memory_space<vmem>>, vector<4x278xf32>,
    %c0_59 = arith.constant 0 : index
    %c0_60 = arith.constant 0 : index
    %c0_61 = arith.constant 0 : index
    %c112 = arith.constant 112 : index
    %42 = vector.load %arg2[%c0_59, %c0_60, %c0_61, %c112] : memref<1x1x4x500xf32, #tpu.memory_space<vmem>>, vector<1x1x4x278xf32>
    %43 = vector.shape_cast %42 : vector<1x1x4x278xf32> to vector<4x278xf32>
    %c56 = arith.constant 56 : index
    %c0_62 = arith.constant 0 : index
    %44 = vector.load %arg7[%c56, %c0_62] : memref<108x278xf32, #tpu.memory_space<vmem>>, vector<4x278xf32>
    tpu.vector_store %arg7[%c56, %c0_62], %43 {strides = array<i32>} : memref<108x278xf32, #tpu.memory_space<vmem>>, vector<4x278xf32>,
    %c0_63 = arith.constant 0 : index
    %c0_64 = arith.constant 0 : index
    %c0_65 = arith.constant 0 : index
    %c120 = arith.constant 120 : index
    %45 = vector.load %arg2[%c0_63, %c0_64, %c0_65, %c120] : memref<1x1x4x500xf32, #tpu.memory_space<vmem>>, vector<1x1x4x278xf32>
    %46 = vector.shape_cast %45 : vector<1x1x4x278xf32> to vector<4x278xf32>
    %c60 = arith.constant 60 : index
    %c0_66 = arith.constant 0 : index
    %47 = vector.load %arg7[%c60, %c0_66] : memref<108x278xf32, #tpu.memory_space<vmem>>, vector<4x278xf32>
    tpu.vector_store %arg7[%c60, %c0_66], %46 {strides = array<i32>} : memref<108x278xf32, #tpu.memory_space<vmem>>, vector<4x278xf32>,
    %c0_67 = arith.constant 0 : index
    %c0_68 = arith.constant 0 : index
    %c0_69 = arith.constant 0 : index
    %c121 = arith.constant 121 : index
    %48 = vector.load %arg2[%c0_67, %c0_68, %c0_69, %c121] : memref<1x1x4x500xf32, #tpu.memory_space<vmem>>, vector<1x1x4x278xf32>
    %49 = vector.shape_cast %48 : vector<1x1x4x278xf32> to vector<4x278xf32>
    %c64 = arith.constant 64 : index
    %c0_70 = arith.constant 0 : index
    %50 = vector.load %arg7[%c64, %c0_70] : memref<108x278xf32, #tpu.memory_space<vmem>>, vector<4x278xf32>
    tpu.vector_store %arg7[%c64, %c0_70], %49 {strides = array<i32>} : memref<108x278xf32, #tpu.memory_space<vmem>>, vector<4x278xf32>,
    %c0_71 = arith.constant 0 : index
    %c0_72 = arith.constant 0 : index
    %c0_73 = arith.constant 0 : index
    %c122 = arith.constant 122 : index
    %51 = vector.load %arg2[%c0_71, %c0_72, %c0_73, %c122] : memref<1x1x4x500xf32, #tpu.memory_space<vmem>>, vector<1x1x4x278xf32>
    %52 = vector.shape_cast %51 : vector<1x1x4x278xf32> to vector<4x278xf32>
    %c68 = arith.constant 68 : index
    %c0_74 = arith.constant 0 : index
    %53 = vector.load %arg7[%c68, %c0_74] : memref<108x278xf32, #tpu.memory_space<vmem>>, vector<4x278xf32>
    tpu.vector_store %arg7[%c68, %c0_74], %52 {strides = array<i32>} : memref<108x278xf32, #tpu.memory_space<vmem>>, vector<4x278xf32>,
    %c0_75 = arith.constant 0 : index
    %c0_76 = arith.constant 0 : index
    %c0_77 = arith.constant 0 : index
    %c200 = arith.constant 200 : index
    %54 = vector.load %arg2[%c0_75, %c0_76, %c0_77, %c200] : memref<1x1x4x500xf32, #tpu.memory_space<vmem>>, vector<1x1x4x278xf32>
    %55 = vector.shape_cast %54 : vector<1x1x4x278xf32> to vector<4x278xf32>
    %c72 = arith.constant 72 : index
    %c0_78 = arith.constant 0 : index
    %56 = vector.load %arg7[%c72, %c0_78] : memref<108x278xf32, #tpu.memory_space<vmem>>, vector<4x278xf32>
    tpu.vector_store %arg7[%c72, %c0_78], %55 {strides = array<i32>} : memref<108x278xf32, #tpu.memory_space<vmem>>, vector<4x278xf32>,
    %c0_79 = arith.constant 0 : index
    %c0_80 = arith.constant 0 : index
    %c0_81 = arith.constant 0 : index
    %c201 = arith.constant 201 : index
    %57 = vector.load %arg2[%c0_79, %c0_80, %c0_81, %c201] : memref<1x1x4x500xf32, #tpu.memory_space<vmem>>, vector<1x1x4x278xf32>
    %58 = vector.shape_cast %57 : vector<1x1x4x278xf32> to vector<4x278xf32>
    %c76 = arith.constant 76 : index
    %c0_82 = arith.constant 0 : index
    %59 = vector.load %arg7[%c76, %c0_82] : memref<108x278xf32, #tpu.memory_space<vmem>>, vector<4x278xf32>
    tpu.vector_store %arg7[%c76, %c0_82], %58 {strides = array<i32>} : memref<108x278xf32, #tpu.memory_space<vmem>>, vector<4x278xf32>,
    %c0_83 = arith.constant 0 : index
    %c0_84 = arith.constant 0 : index
    %c0_85 = arith.constant 0 : index
    %c202 = arith.constant 202 : index
    %60 = vector.load %arg2[%c0_83, %c0_84, %c0_85, %c202] : memref<1x1x4x500xf32, #tpu.memory_space<vmem>>, vector<1x1x4x278xf32>
    %61 = vector.shape_cast %60 : vector<1x1x4x278xf32> to vector<4x278xf32>
    %c80 = arith.constant 80 : index
    %c0_86 = arith.constant 0 : index
    %62 = vector.load %arg7[%c80, %c0_86] : memref<108x278xf32, #tpu.memory_space<vmem>>, vector<4x278xf32>
    tpu.vector_store %arg7[%c80, %c0_86], %61 {strides = array<i32>} : memref<108x278xf32, #tpu.memory_space<vmem>>, vector<4x278xf32>,
    %c0_87 = arith.constant 0 : index
    %c0_88 = arith.constant 0 : index
    %c0_89 = arith.constant 0 : index
    %c210 = arith.constant 210 : index
    %63 = vector.load %arg2[%c0_87, %c0_88, %c0_89, %c210] : memref<1x1x4x500xf32, #tpu.memory_space<vmem>>, vector<1x1x4x278xf32>
    %64 = vector.shape_cast %63 : vector<1x1x4x278xf32> to vector<4x278xf32>
    %c84 = arith.constant 84 : index
    %c0_90 = arith.constant 0 : index
    %65 = vector.load %arg7[%c84, %c0_90] : memref<108x278xf32, #tpu.memory_space<vmem>>, vector<4x278xf32>
    tpu.vector_store %arg7[%c84, %c0_90], %64 {strides = array<i32>} : memref<108x278xf32, #tpu.memory_space<vmem>>, vector<4x278xf32>,
    %c0_91 = arith.constant 0 : index
    %c0_92 = arith.constant 0 : index
    %c0_93 = arith.constant 0 : index
    %c211 = arith.constant 211 : index
    %66 = vector.load %arg2[%c0_91, %c0_92, %c0_93, %c211] : memref<1x1x4x500xf32, #tpu.memory_space<vmem>>, vector<1x1x4x278xf32>
    %67 = vector.shape_cast %66 : vector<1x1x4x278xf32> to vector<4x278xf32>
    %c88 = arith.constant 88 : index
    %c0_94 = arith.constant 0 : index
    %68 = vector.load %arg7[%c88, %c0_94] : memref<108x278xf32, #tpu.memory_space<vmem>>, vector<4x278xf32>
    tpu.vector_store %arg7[%c88, %c0_94], %67 {strides = array<i32>} : memref<108x278xf32, #tpu.memory_space<vmem>>, vector<4x278xf32>,
    %c0_95 = arith.constant 0 : index
    %c0_96 = arith.constant 0 : index
    %c0_97 = arith.constant 0 : index
    %c212 = arith.constant 212 : index
    %69 = vector.load %arg2[%c0_95, %c0_96, %c0_97, %c212] : memref<1x1x4x500xf32, #tpu.memory_space<vmem>>, vector<1x1x4x278xf32>
    %70 = vector.shape_cast %69 : vector<1x1x4x278xf32> to vector<4x278xf32>
    %c92 = arith.constant 92 : index
    %c0_98 = arith.constant 0 : index
    %71 = vector.load %arg7[%c92, %c0_98] : memref<108x278xf32, #tpu.memory_space<vmem>>, vector<4x278xf32>
    tpu.vector_store %arg7[%c92, %c0_98], %70 {strides = array<i32>} : memref<108x278xf32, #tpu.memory_space<vmem>>, vector<4x278xf32>,
    %c0_99 = arith.constant 0 : index
    %c0_100 = arith.constant 0 : index
    %c0_101 = arith.constant 0 : index
    %c220 = arith.constant 220 : index
    %72 = vector.load %arg2[%c0_99, %c0_100, %c0_101, %c220] : memref<1x1x4x500xf32, #tpu.memory_space<vmem>>, vector<1x1x4x278xf32>
    %73 = vector.shape_cast %72 : vector<1x1x4x278xf32> to vector<4x278xf32>
    %c96 = arith.constant 96 : index
    %c0_102 = arith.constant 0 : index
    %74 = vector.load %arg7[%c96, %c0_102] : memref<108x278xf32, #tpu.memory_space<vmem>>, vector<4x278xf32>
    tpu.vector_store %arg7[%c96, %c0_102], %73 {strides = array<i32>} : memref<108x278xf32, #tpu.memory_space<vmem>>, vector<4x278xf32>,
    %c0_103 = arith.constant 0 : index
    %c0_104 = arith.constant 0 : index
    %c0_105 = arith.constant 0 : index
    %c221 = arith.constant 221 : index
    %75 = vector.load %arg2[%c0_103, %c0_104, %c0_105, %c221] : memref<1x1x4x500xf32, #tpu.memory_space<vmem>>, vector<1x1x4x278xf32>
    %76 = vector.shape_cast %75 : vector<1x1x4x278xf32> to vector<4x278xf32>
    %c100_106 = arith.constant 100 : index
    %c0_107 = arith.constant 0 : index
    %77 = vector.load %arg7[%c100_106, %c0_107] : memref<108x278xf32, #tpu.memory_space<vmem>>, vector<4x278xf32>
    tpu.vector_store %arg7[%c100_106, %c0_107], %76 {strides = array<i32>} : memref<108x278xf32, #tpu.memory_space<vmem>>, vector<4x278xf32>,
    %c0_108 = arith.constant 0 : index
    %c0_109 = arith.constant 0 : index
    %c0_110 = arith.constant 0 : index
    %c222 = arith.constant 222 : index
    %78 = vector.load %arg2[%c0_108, %c0_109, %c0_110, %c222] : memref<1x1x4x500xf32, #tpu.memory_space<vmem>>, vector<1x1x4x278xf32>
    %79 = vector.shape_cast %78 : vector<1x1x4x278xf32> to vector<4x278xf32>
    %c104 = arith.constant 104 : index
    %c0_111 = arith.constant 0 : index
    %80 = vector.load %arg7[%c104, %c0_111] : memref<108x278xf32, #tpu.memory_space<vmem>>, vector<4x278xf32>
    tpu.vector_store %arg7[%c104, %c0_111], %79 {strides = array<i32>} : memref<108x278xf32, #tpu.memory_space<vmem>>, vector<4x278xf32>,
    %c0_112 = arith.constant 0 : index
    %c0_113 = arith.constant 0 : index
    %81 = vector.load %arg3[%c0_112, %c0_113] : memref<8x108xf32, #tpu.memory_space<vmem>>, vector<8x108xf32>
    %c0_114 = arith.constant 0 : index
    %c0_115 = arith.constant 0 : index
    %82 = vector.load %arg7[%c0_114, %c0_115] : memref<108x278xf32, #tpu.memory_space<vmem>>, vector<108x278xf32>
    %cst = arith.constant dense<0.000000e+00> : vector<8x278xf32>
    %83 = tpu.matmul %81, %82, %cst {dimension_numbers = #tpu.dot_dimension_numbers<[1], [0], [0], [1], [0, 0, 1, 1], [], []>} : vector<8x108xf32>, vector<108x278xf32>, vector<8x278xf32> -> vector<8x278xf32>
    %c0_116 = arith.constant 0 : index
    %c0_117 = arith.constant 0 : index
    %84 = vector.load %arg4[%c0_116, %c0_117] : memref<8x1xf32, #tpu.memory_space<vmem>>, vector<8x1xf32>
    %85 = vector.broadcast %84 : vector<8x1xf32> to vector<8x278xf32>
    %86 = arith.mulf %83, %85 : vector<8x278xf32>
    %c0_118 = arith.constant 0 : index
    %c0_119 = arith.constant 0 : index
    %87 = vector.load %arg5[%c0_118, %c0_119] : memref<8x1xf32, #tpu.memory_space<vmem>>, vector<8x1xf32>
    %88 = vector.broadcast %87 : vector<8x1xf32> to vector<8x278xf32>
    %89 = arith.addf %86, %88 : vector<8x278xf32>
    %cst_120 = arith.constant 0.000000e+00 : f32
    %90 = vector.broadcast %cst_120 : f32 to vector<8x278xf32>
    %91 = arith.cmpf ogt, %89, %90 : vector<8x278xf32>
    %cst_121 = arith.constant 0.000000e+00 : f32
    %92 = vector.broadcast %cst_121 : f32 to vector<8x278xf32>
    %93 = arith.minimumf %89, %92 : vector<8x278xf32>
    %94 = math.exp %93 : vector<8x278xf32>
    %cst_122 = arith.constant 1.000000e+00 : f32
    %95 = vector.broadcast %cst_122 : f32 to vector<8x278xf32>
    %96 = arith.subf %94, %95 : vector<8x278xf32>
    %97 = arith.select %91, %89, %96 : vector<8x278xi1>, vector<8x278xf32>
    %98 = vector.extract_strided_slice %97 {offsets = [0, 0], sizes = [8, 276], strides = [1, 1]} : vector<8x278xf32> to vector<8x276xf32>
    %99 = vector.extract_strided_slice %97 {offsets = [0, 1], sizes = [8, 276], strides = [1, 1]} : vector<8x278xf32> to vector<8x276xf32>
    %100 = arith.maximumf %98, %99 : vector<8x276xf32>
    %101 = vector.extract_strided_slice %97 {offsets = [0, 2], sizes = [8, 276], strides = [1, 1]} : vector<8x278xf32> to vector<8x276xf32>
    %102 = arith.maximumf %100, %101 : vector<8x276xf32>
    %103 = vector.extract_strided_slice %102 {offsets = [0, 0], sizes = [8, 256], strides = [1, 1]} : vector<8x276xf32> to vector<8x256xf32>
    %104 = vector.extract_strided_slice %102 {offsets = [0, 10], sizes = [8, 256], strides = [1, 1]} : vector<8x276xf32> to vector<8x256xf32>
    %105 = arith.maximumf %103, %104 : vector<8x256xf32>
    %106 = vector.extract_strided_slice %102 {offsets = [0, 20], sizes = [8, 256], strides = [1, 1]} : vector<8x276xf32> to vector<8x256xf32>
    %107 = arith.maximumf %105, %106 : vector<8x256xf32>
    %108 = vector.extract_strided_slice %107 {offsets = [0, 0], sizes = [8, 56], strides = [1, 1]} : vector<8x256xf32> to vector<8x56xf32>
    %109 = vector.extract_strided_slice %107 {offsets = [0, 100], sizes = [8, 56], strides = [1, 1]} : vector<8x256xf32> to vector<8x56xf32>
    %110 = arith.maximumf %108, %109 : vector<8x56xf32>
    %111 = vector.extract_strided_slice %107 {offsets = [0, 200], sizes = [8, 56], strides = [1, 1]} : vector<8x256xf32> to vector<8x56xf32>
    %112 = arith.maximumf %110, %111 : vector<8x56xf32>
    %c0_123 = arith.constant 0 : index
    %c0_124 = arith.constant 0 : index
    %c0_125 = arith.constant 0 : index
    %c0_126 = arith.constant 0 : index
    %113 = vector.load %arg6[%c0_123, %c0_124, %c0_125, %c0_126] : memref<1x1x8x56xf32, #tpu.memory_space<vmem>>, vector<1x1x8x56xf32>
    %114 = vector.shape_cast %113 : vector<1x1x8x56xf32> to vector<8x56xf32>
    %115 = vector.shape_cast %112 : vector<8x56xf32> to vector<1x1x8x56xf32>
    tpu.vector_store %arg6[%c0_123, %c0_124, %c0_125, %c0_126], %115 {strides = array<i32>} : memref<1x1x8x56xf32, #tpu.memory_space<vmem>>, vector<1x1x8x56xf32>,
    return
  }
  func.func @transform_0(%arg0: i32, %arg1: i32) -> (i32, i32, i32, i32) {
    %c0_i32 = arith.constant 0 : i32
    %c0_i32_0 = arith.constant 0 : i32
    %c0_i32_1 = arith.constant 0 : i32
    return %arg0, %arg1, %c0_i32, %c0_i32_0 : i32, i32, i32, i32
  }
  func.func @transform_1(%arg0: i32, %arg1: i32) -> (i32, i32) {
    %c0_i32 = arith.constant 0 : i32
    %c0_i32_0 = arith.constant 0 : i32
    %c0_i32_1 = arith.constant 0 : i32
    return %c0_i32, %c0_i32_0 : i32, i32
  }
  func.func @transform_2(%arg0: i32, %arg1: i32) -> (i32, i32) {
    %c0_i32 = arith.constant 0 : i32
    %c0_i32_0 = arith.constant 0 : i32
    %c0_i32_1 = arith.constant 0 : i32
    return %c0_i32, %c0_i32_0 : i32, i32
  }
  func.func @transform_3(%arg0: i32, %arg1: i32) -> (i32, i32) {
    %c0_i32 = arith.constant 0 : i32
    %c0_i32_0 = arith.constant 0 : i32
    %c0_i32_1 = arith.constant 0 : i32
    return %c0_i32, %c0_i32_0 : i32, i32
  }
  func.func @transform_4(%arg0: i32, %arg1: i32) -> (i32, i32, i32, i32) {
    %c0_i32 = arith.constant 0 : i32
    %c0_i32_0 = arith.constant 0 : i32
    %c0_i32_1 = arith.constant 0 : i32
    return %arg0, %arg1, %c0_i32, %c0_i32_0 : i32, i32, i32, i32
  }
}

</mosaic_0001>

<llo_original>
// kernel: conv_block_forward.1
$region0: #{conv_block_forward.1}
  #allocation0 [shape = 'u32[]', space=smem, size = 0x4, offset = 0x4, fixed_abs, tag = 'smem constant byte address 0x4 - core index']
  #allocation1 [shape = 'u32[144,128]{1,0:T(1,128)}', space=vmem, size = 0x12000, scoped, tag = 'internal scratch']
  #allocation2 [shape = 'f32[108,278]{1,0:T(8,128)}', space=vmem, size = 0x2a000, scoped, tag = 'scratch operand']
  %s0 = inlined_call_operand.vmem [shape: f32[2,3,4,500], index: 0, kind: input, shape index: {}]
  %s1 = inlined_call_operand.vmem [shape: f32[8,108], index: 1, kind: input, shape index: {}]
  %s2 = inlined_call_operand.vmem [shape: f32[8,1], index: 2, kind: input, shape index: {}]
  %s3 = inlined_call_operand.vmem [shape: f32[8,1], index: 3, kind: input, shape index: {}]
  %s4 = inlined_call_operand.vmem [shape: f32[2,3,8,56], index: 4, kind: output, shape index: {}]
  %s5 = sld [smem:[#allocation0]]
  $region49: #{conv_block_forward.1} parent=0
    _
  %s7 = ssub.s32 1, %s5
  %s8 = scalar_select 0, %s7, %s5
  loop: start=0, step=1, limit=8
  $region2: #{conv_block_forward.1} parent=0 // loop_pre_header
    _
  $region3: #{conv_block_forward.1} parent=0 // loop_header
    %s10 = sphi 0, %s14
    %p11 = scmp.ge.s32.totalorder %s10, 8
    %s17 = sphi 0, %s29
    %s18 = sphi 0, %s25
    %s19 = sphi 0, %s17
    %s20 = sphi 0, %s18
    %s21 = sphi 0, %s19
    %s22 = sphi 0, %s20
    %s34 = sphi 0, %s36
    %s37 = sphi 0, %s34
    %s38 = sphi 0, %s37
    %s54 = sphi 0, %s38
    %s58 = sphi 0, %s58
    %s60 = sphi 0, %s58
    %s61 = sphi 0, %s60
    %s75 = sphi 0, %s61
    %s79 = sphi 0, %s79
    %s81 = sphi 0, %s79
    %s82 = sphi 0, %s81
    %s96 = sphi 0, %s82
    %s100 = sphi 0, %s100
    %s102 = sphi 0, %s100
    %s103 = sphi 0, %s102
    %s117 = sphi 0, %s103
    %s125 = sphi 0, %s127
    %s128 = sphi 0, %s125
    %s129 = sphi 0, %s128
    %s145 = sphi 0, %s129
  $region4: #{conv_block_forward.1} parent=0 // loop_header_branch
    %13 = sbr.rel (%p11) target = $region8
  $region5: #{conv_block_forward.1} parent=0 // loop_body
    %s15 = ssub.s32 %s10, 1
    %s16 = ssub.s32 %s10, 2
    %s23 = sadd.s32 1, %s18
    %p24 = scmp.ge.s32.totalorder %s23, 3
    %s25 = scalar_select %p24, 0, %s23
    %s26 = sadd.s32 1, %s17
    %s27 = scalar_select %p24, %s26, %s17
    %p28 = scmp.ge.s32.totalorder %s27, 2
    %s29 = scalar_select %p28, 0, %s27
    %s30 = ssub.s32 %s17, %s29
    %s31 = ssub.s32 %s18, %s25
    %s32 = sor.u32 %s30, %s31
    %p33 = scmp.eq.s32.totalorder %s32, 0
    %s35 = sadd.s32 %s34, 1
    %s36 = scalar_select %p33, %s34, %s35
    %p39 = pneg %p33
    %p40 = scmp.eq.s32.totalorder %s10, 5
    %p41 = por %p39, %p40
    %p42 = scmp.ne.s32.totalorder %s34, %s37
    %p43 = scmp.eq.s32.totalorder %s10, 0
    %p44 = por %p42, %p43
    %p45 = scmp.ne.s32.totalorder %s34, %s37
    %p46 = scmp.eq.s32.totalorder %s15, 5
    %p47 = por %p45, %p46
    %p48 = scmp.ne.s32.totalorder %s37, %s38
    %p49 = scmp.eq.s32.totalorder %s15, 0
    %p50 = por %p48, %p49
    %p51 = scmp.ne.s32.totalorder %s37, %s38
    %p52 = scmp.eq.s32.totalorder %s16, 5
    %p53 = por %p51, %p52
    %p55 = scmp.ne.s32.totalorder %s38, %s54
    %p56 = scmp.eq.s32.totalorder %s16, 0
    %p57 = por %p55, %p56
    %s59 = sadd.s32 %s58, 1
    %p62 = scmp.eq.s32.totalorder %s10, 5
    %p63 = scmp.ne.s32.totalorder %s58, %s60
    %p64 = scmp.eq.s32.totalorder %s10, 0
    %p65 = por %p63, %p64
    %p66 = scmp.ne.s32.totalorder %s58, %s60
    %p67 = scmp.eq.s32.totalorder %s15, 5
    %p68 = por %p66, %p67
    %p69 = scmp.ne.s32.totalorder %s60, %s61
    %p70 = scmp.eq.s32.totalorder %s15, 0
    %p71 = por %p69, %p70
    %p72 = scmp.ne.s32.totalorder %s60, %s61
    %p73 = scmp.eq.s32.totalorder %s16, 5
    %p74 = por %p72, %p73
    %p76 = scmp.ne.s32.totalorder %s61, %s75
    %p77 = scmp.eq.s32.totalorder %s16, 0
    %p78 = por %p76, %p77
    %s80 = sadd.s32 %s79, 1
    %p83 = scmp.eq.s32.totalorder %s10, 5
    %p84 = scmp.ne.s32.totalorder %s79, %s81
    %p85 = scmp.eq.s32.totalorder %s10, 0
    %p86 = por %p84, %p85
    %p87 = scmp.ne.s32.totalorder %s79, %s81
    %p88 = scmp.eq.s32.totalorder %s15, 5
    %p89 = por %p87, %p88
    %p90 = scmp.ne.s32.totalorder %s81, %s82
    %p91 = scmp.eq.s32.totalorder %s15, 0
    %p92 = por %p90, %p91
    %p93 = scmp.ne.s32.totalorder %s81, %s82
    %p94 = scmp.eq.s32.totalorder %s16, 5
    %p95 = por %p93, %p94
    %p97 = scmp.ne.s32.totalorder %s82, %s96
    %p98 = scmp.eq.s32.totalorder %s16, 0
    %p99 = por %p97, %p98
    %s101 = sadd.s32 %s100, 1
    %p104 = scmp.eq.s32.totalorder %s10, 5
    %p105 = scmp.ne.s32.totalorder %s100, %s102
    %p106 = scmp.eq.s32.totalorder %s10, 0
    %p107 = por %p105, %p106
    %p108 = scmp.ne.s32.totalorder %s100, %s102
    %p109 = scmp.eq.s32.totalorder %s15, 5
    %p110 = por %p108, %p109
    %p111 = scmp.ne.s32.totalorder %s102, %s103
    %p112 = scmp.eq.s32.totalorder %s15, 0
    %p113 = por %p111, %p112
    %p114 = scmp.ne.s32.totalorder %s102, %s103
    %p115 = scmp.eq.s32.totalorder %s16, 5
    %p116 = por %p114, %p115
    %p118 = scmp.ne.s32.totalorder %s103, %s117
    %p119 = scmp.eq.s32.totalorder %s16, 0
    %p120 = por %p118, %p119
    %s121 = ssub.s32 %s17, %s29
    %s122 = ssub.s32 %s18, %s25
    %s123 = sor.u32 %s121, %s122
    %p124 = scmp.eq.s32.totalorder %s123, 0
    %s126 = sadd.s32 %s125, 1
    %s127 = scalar_select %p124, %s125, %s126
    %p130 = pneg %p124
    %p131 = scmp.eq.s32.totalorder %s10, 5
    %p132 = por %p130, %p131
    %p133 = scmp.ne.s32.totalorder %s125, %s128
    %p134 = scmp.eq.s32.totalorder %s10, 0
    %p135 = por %p133, %p134
    %p136 = scmp.ne.s32.totalorder %s125, %s128
    %p137 = scmp.eq.s32.totalorder %s15, 5
    %p138 = por %p136, %p137
    %p139 = scmp.ne.s32.totalorder %s128, %s129
    %p140 = scmp.eq.s32.totalorder %s15, 0
    %p141 = por %p139, %p140
    %p142 = scmp.ne.s32.totalorder %s128, %s129
    %p143 = scmp.eq.s32.totalorder %s16, 5
    %p144 = por %p142, %p143
    %p146 = scmp.ne.s32.totalorder %s129, %s145
    %p147 = scmp.eq.s32.totalorder %s16, 0
    %p148 = por %p146, %p147
    %p149 = scmp.le.s32.totalorder 1, %s10
    %p150 = scmp.lt.s32.totalorder %s10, 7
    %p151 = pnand %p149, %p150
    %p152 = pneg %p151
    // Predicated region
    $region9: #{conv_block_forward.1} parent=5 // pred_check
      _
    $region10: #{conv_block_forward.1} parent=5 // pred_check_branch
      %154 = sbr.rel (%p151) target = $region12
    $region11: #{conv_block_forward.1} parent=5 // pred_region
      %s155 = ssub.s32 %s10, 1
      // Predicated region
      $region13: #{conv_block_forward.1} parent=11 // pred_check
        %p156 = pneg %p71
      $region14: #{conv_block_forward.1} parent=11 // pred_check_branch
        %158 = sbr.rel (%p156) target = $region16
      $region15: #{conv_block_forward.1} parent=11 // pred_region
        _
      $region16: #{conv_block_forward.1} parent=11 // pred_fallthru
        _
      // Predicated region
      $region17: #{conv_block_forward.1} parent=11 // pred_check
        %p159 = pneg %p92
      $region18: #{conv_block_forward.1} parent=11 // pred_check_branch
        %161 = sbr.rel (%p159) target = $region20
      $region19: #{conv_block_forward.1} parent=11 // pred_region
        _
      $region20: #{conv_block_forward.1} parent=11 // pred_fallthru
        _
      // Predicated region
      $region21: #{conv_block_forward.1} parent=11 // pred_check
        %p162 = pneg %p113
      $region22: #{conv_block_forward.1} parent=11 // pred_check_branch
        %164 = sbr.rel (%p162) target = $region24
      $region23: #{conv_block_forward.1} parent=11 // pred_region
        _
      $region24: #{conv_block_forward.1} parent=11 // pred_fallthru
        _
    $region12: #{conv_block_forward.1} parent=5 // pred_fallthru
      _
    %p165 = scmp.lt.s32.totalorder %s10, 6
    // Predicated region
    $region25: #{conv_block_forward.1} parent=5 // pred_check
      %p166 = pneg %p165
    $region26: #{conv_block_forward.1} parent=5 // pred_check_branch
      %168 = sbr.rel (%p166) target = $region28
    $region27: #{conv_block_forward.1} parent=5 // pred_region
      // Predicated region
      $region29: #{conv_block_forward.1} parent=27 // pred_check
        %p169 = pneg %p44
      $region30: #{conv_block_forward.1} parent=27 // pred_check_branch
        %171 = sbr.rel (%p169) target = $region32
      $region31: #{conv_block_forward.1} parent=27 // pred_region
        %p172 = scmp.lt.s32.totalorder %s17, 1
        %s173 = scalar_select %p172, %s17, 1
        %p174 = scmp.lt.s32.totalorder %s18, 2
        %s175 = scalar_select %p174, %s18, 2
        %s176 = smul.addr %s175, 4
        %s177 = smul.addr %s173, 12
        %s178 = sadd.s32 %s176, %s177
        %s179 = smul.addr %s178, 4
        %s180 = scalar_lea.vmem %s0, %s179
      $region32: #{conv_block_forward.1} parent=27 // pred_fallthru
        _
    $region28: #{conv_block_forward.1} parent=5 // pred_fallthru
      _
    %p181 = scmp.le.s32.totalorder 1, %s10
    %p182 = scmp.lt.s32.totalorder %s10, 7
    %p183 = pnand %p181, %p182
    %p184 = pneg %p183
    // Predicated region
    $region33: #{conv_block_forward.1} parent=5 // pred_check
      _
    $region34: #{conv_block_forward.1} parent=5 // pred_check_branch
      %186 = sbr.rel (%p183) target = $region36
    $region35: #{conv_block_forward.1} parent=5 // pred_region
      %s187 = ssub.s32 %s10, 1
      %p188 = scmp.lt.s32.totalorder %s19, 1
      %s189 = scalar_select %p188, %s19, 1
      %p190 = scmp.lt.s32.totalorder %s20, 2
      %s191 = scalar_select %p190, %s20, 2
      %s192 = smul.addr %s191, 4
      %s193 = smul.addr %s189, 12
      %s194 = sadd.s32 %s192, %s193
      %s195 = smul.addr %s194, 4
      %s196 = scalar_lea.vmem %s0, %s195
      %p197 = pneg %p50
      %p198 = pneg %p47
      %p199 = pneg %p71
      %p200 = pneg %p68
      %p201 = pneg %p92
      %p202 = pneg %p89
      %p203 = pneg %p113
      %p204 = pneg %p110
      %p205 = pneg %p141
      %p206 = pneg %p138
      %p207 = scmp.lt.s32.totalorder %s19, 1
      %s208 = scalar_select %p207, %s19, 1
      %p209 = scmp.lt.s32.totalorder %s20, 2
      %s210 = scalar_select %p209, %s20, 2
      %s211 = smul.addr %s208, 3
      %s212 = sadd.s32 %s210, %s211
      %s213 = smul.addr %s212, 8
      %s214 = scalar_lea.vmem %s4, %s213
      %p215 = scmp.lt.s32.totalorder %s19, 1
      %s216 = scalar_select %p215, %s19, 1
      %p217 = scmp.lt.s32.totalorder %s20, 2
      %s218 = scalar_select %p217, %s20, 2
      %s219 = smul.addr %s218, 4
      %s220 = smul.addr %s216, 12
      %s221 = sadd.s32 %s219, %s220
      %s222 = smul.addr %s221, 4
      %s223 = scalar_lea.vmem %s0, %s222
      %p224 = scmp.lt.s32.totalorder %s19, 1
      %s225 = scalar_select %p224, %s19, 1
      %p226 = scmp.lt.s32.totalorder %s20, 2
      %s227 = scalar_select %p226, %s20, 2
      %s228 = smul.addr %s225, 3
      %s229 = sadd.s32 %s227, %s228
      %s230 = smul.addr %s229, 8
      %s231 = scalar_lea.vmem %s4, %s230
      %v232 = vld [vmem:[%s223] sm:$0xff]
      %v233 = vld [vmem:[%s223 + $0x8] sm:$0xf]
      %v235 = vcombine.high %v232, %v232
      %237 = vst [vmem:[#allocation2] sm:$0xf] %v232
      %238 = vst [vmem:[#allocation2 + $0x8] sm:$0xf] %v235
      %vm239 = vcmask 175104
      %240 = vst.msk [vmem:[#allocation2 + $0x10] sm:$0xf] %vm239, %v233
      %v241 = vld [vmem:[%s223] sm:$0xff]
      %v242 = vld [vmem:[%s223 + $0x8] sm:$0xf]
      %v245 = vcombine.low %v241, %v241
      %v246 = vcombine.low %v242, %v242
      %247 = vrot.lane.b32.xlu0 %v245, 127
      %v248 = vpop.permute.xlu0 %247
      %249 = vrot.lane.b32.xlu0 %v241, 127
      %v250 = vpop.permute.xlu0 %249
      %251 = vrot.lane.b32.xlu0 %v246, 127
      %v252 = vpop.permute.xlu0 %251
      %vm253 = vcmask 1039360
      %v254 = vsel %vm253, %v248, %v250
      %v255 = vsel %vm253, %v250, %v252
      %259 = vst [vmem:[#allocation2] sm:$0xf0] %v254
      %260 = vst [vmem:[#allocation2 + $0x8] sm:$0xf0] %v255
      %vm261 = vcmask 179204
      %262 = vst.msk [vmem:[#allocation2 + $0x10] sm:$0xf0] %vm261, %v252
      %v263 = vld [vmem:[%s223] sm:$0xff]
      %v264 = vld [vmem:[%s223 + $0x8] sm:$0xf]
      %v267 = vcombine.high %v263, %v263
      %268 = vrot.lane.b32.xlu0 %v263, 126
      %v269 = vpop.permute.xlu0 %268
      %270 = vrot.lane.b32.xlu0 %v267, 126
      %v271 = vpop.permute.xlu0 %270
      %272 = vrot.lane.b32.xlu0 %v264, 126
      %v273 = vpop.permute.xlu0 %272
      %vm274 = vcmask 1031168
      %v275 = vsel %vm274, %v269, %v271
      %v276 = vsel %vm274, %v271, %v273
      %280 = vst [vmem:[#allocation2 + $0x18] sm:$0xf] %v275
      %281 = vst [vmem:[#allocation2 + $0x20] sm:$0xf] %v276
      %282 = vst.msk [vmem:[#allocation2 + $0x28] sm:$0xf] %vm239, %v273
      %v283 = vld [vmem:[%s223] sm:$0xff]
      %v284 = vld [vmem:[%s223 + $0x8] sm:$0xf]
      %v287 = vcombine.low %v283, %v283
      %v288 = vcombine.low %v284, %v284
      %289 = vrot.lane.b32.xlu0 %v287, 118
      %v290 = vpop.permute.xlu0 %289
      %291 = vrot.lane.b32.xlu0 %v283, 118
      %v292 = vpop.permute.xlu0 %291
      %293 = vrot.lane.b32.xlu0 %v288, 118
      %v294 = vpop.permute.xlu0 %293
      %vm295 = vcmask 965632
      %v296 = vsel %vm295, %v290, %v292
      %v297 = vsel %vm295, %v292, %v294
      %301 = vst [vmem:[#allocation2 + $0x18] sm:$0xf0] %v296
      %302 = vst [vmem:[#allocation2 + $0x20] sm:$0xf0] %v297
      %303 = vst.msk [vmem:[#allocation2 + $0x28] sm:$0xf0] %vm261, %v294
      %v304 = vld [vmem:[%s223] sm:$0xff]
      %v305 = vld [vmem:[%s223 + $0x8] sm:$0xf]
      %v308 = vcombine.high %v304, %v304
      %309 = vrot.lane.b32.xlu0 %v304, 117
      %v310 = vpop.permute.xlu0 %309
      %311 = vrot.lane.b32.xlu0 %v308, 117
      %v312 = vpop.permute.xlu0 %311
      %313 = vrot.lane.b32.xlu0 %v305, 117
      %v314 = vpop.permute.xlu0 %313
      %vm315 = vcmask 957440
      %v316 = vsel %vm315, %v310, %v312
      %v317 = vsel %vm315, %v312, %v314
      %321 = vst [vmem:[#allocation2 + $0x30] sm:$0xf] %v316
      %322 = vst [vmem:[#allocation2 + $0x38] sm:$0xf] %v317
      %323 = vst.msk [vmem:[#allocation2 + $0x40] sm:$0xf] %vm239, %v314
      %v324 = vld [vmem:[%s223] sm:$0xff]
      %v325 = vld [vmem:[%s223 + $0x8] sm:$0xf]
      %v328 = vcombine.low %v324, %v324
      %v329 = vcombine.low %v325, %v325
      %330 = vrot.lane.b32.xlu0 %v328, 116
      %v331 = vpop.permute.xlu0 %330
      %332 = vrot.lane.b32.xlu0 %v324, 116
      %v333 = vpop.permute.xlu0 %332
      %334 = vrot.lane.b32.xlu0 %v329, 116
      %v335 = vpop.permute.xlu0 %334
      %vm336 = vcmask 949248
      %v337 = vsel %vm336, %v331, %v333
      %v338 = vsel %vm336, %v333, %v335
      %342 = vst [vmem:[#allocation2 + $0x30] sm:$0xf0] %v337
      %343 = vst [vmem:[#allocation2 + $0x38] sm:$0xf0] %v338
      %344 = vst.msk [vmem:[#allocation2 + $0x40] sm:$0xf0] %vm261, %v335
      %v345 = vld [vmem:[%s223] sm:$0xff]
      %v346 = vld [vmem:[%s223 + $0x8] sm:$0xf]
      %v349 = vcombine.high %v345, %v345
      %350 = vrot.lane.b32.xlu0 %v345, 108
      %v351 = vpop.permute.xlu0 %350
      %352 = vrot.lane.b32.xlu0 %v349, 108
      %v353 = vpop.permute.xlu0 %352
      %354 = vrot.lane.b32.xlu0 %v346, 108
      %v355 = vpop.permute.xlu0 %354
      %vm356 = vcmask 883712
      %v357 = vsel %vm356, %v351, %v353
      %v358 = vsel %vm356, %v353, %v355
      %362 = vst [vmem:[#allocation2 + $0x48] sm:$0xf] %v357
      %363 = vst [vmem:[#allocation2 + $0x50] sm:$0xf] %v358
      %364 = vst.msk [vmem:[#allocation2 + $0x58] sm:$0xf] %vm239, %v355
      %v365 = vld [vmem:[%s223] sm:$0xff]
      %v366 = vld [vmem:[%s223 + $0x8] sm:$0xf]
      %v369 = vcombine.low %v365, %v365
      %v370 = vcombine.low %v366, %v366
      %371 = vrot.lane.b32.xlu0 %v369, 107
      %v372 = vpop.permute.xlu0 %371
      %373 = vrot.lane.b32.xlu0 %v365, 107
      %v374 = vpop.permute.xlu0 %373
      %375 = vrot.lane.b32.xlu0 %v370, 107
      %v376 = vpop.permute.xlu0 %375
      %vm377 = vcmask 875520
      %v378 = vsel %vm377, %v372, %v374
      %v379 = vsel %vm377, %v374, %v376
      %383 = vst [vmem:[#allocation2 + $0x48] sm:$0xf0] %v378
      %384 = vst [vmem:[#allocation2 + $0x50] sm:$0xf0] %v379
      %385 = vst.msk [vmem:[#allocation2 + $0x58] sm:$0xf0] %vm261, %v376
      %v386 = vld [vmem:[%s223] sm:$0xff]
      %v387 = vld [vmem:[%s223 + $0x8] sm:$0xf]
      %v390 = vcombine.high %v386, %v386
      %391 = vrot.lane.b32.xlu0 %v386, 106
      %v392 = vpop.permute.xlu0 %391
      %393 = vrot.lane.b32.xlu0 %v390, 106
      %v394 = vpop.permute.xlu0 %393
      %395 = vrot.lane.b32.xlu0 %v387, 106
      %v396 = vpop.permute.xlu0 %395
      %vm397 = vcmask 867328
      %v398 = vsel %vm397, %v392, %v394
      %v399 = vsel %vm397, %v394, %v396
      %403 = vst [vmem:[#allocation2 + $0x60] sm:$0xf] %v398
      %404 = vst [vmem:[#allocation2 + $0x68] sm:$0xf] %v399
      %405 = vst.msk [vmem:[#allocation2 + $0x70] sm:$0xf] %vm239, %v396
      %v406 = vld [vmem:[%s223] sm:$0xff]
      %v407 = vld [vmem:[%s223 + $0x8] sm:$0xf]
      %v410 = vcombine.low %v406, %v406
      %v411 = vcombine.low %v407, %v407
      %412 = vrot.lane.b32.xlu0 %v410, 28
      %v413 = vpop.permute.xlu0 %412
      %414 = vrot.lane.b32.xlu0 %v406, 28
      %v415 = vpop.permute.xlu0 %414
      %416 = vrot.lane.b32.xlu0 %v411, 28
      %v417 = vpop.permute.xlu0 %416
      %vm418 = vcmask 228352
      %v419 = vsel %vm418, %v413, %v415
      %v420 = vsel %vm418, %v415, %v417
      %424 = vst [vmem:[#allocation2 + $0x60] sm:$0xf0] %v419
      %425 = vst [vmem:[#allocation2 + $0x68] sm:$0xf0] %v420
      %426 = vst.msk [vmem:[#allocation2 + $0x70] sm:$0xf0] %vm261, %v417
      %v427 = vld [vmem:[%s223] sm:$0xff]
      %v428 = vld [vmem:[%s223 + $0x8] sm:$0xf]
      %v431 = vcombine.high %v427, %v427
      %432 = vrot.lane.b32.xlu0 %v427, 27
      %v433 = vpop.permute.xlu0 %432
      %434 = vrot.lane.b32.xlu0 %v431, 27
      %v435 = vpop.permute.xlu0 %434
      %436 = vrot.lane.b32.xlu0 %v428, 27
      %v437 = vpop.permute.xlu0 %436
      %vm438 = vcmask 220160
      %v439 = vsel %vm438, %v433, %v435
      %v440 = vsel %vm438, %v435, %v437
      %444 = vst [vmem:[#allocation2 + $0x78] sm:$0xf] %v439
      %445 = vst [vmem:[#allocation2 + $0x80] sm:$0xf] %v440
      %446 = vst.msk [vmem:[#allocation2 + $0x88] sm:$0xf] %vm239, %v437
      %v447 = vld [vmem:[%s223] sm:$0xff]
      %v448 = vld [vmem:[%s223 + $0x8] sm:$0xf]
      %v451 = vcombine.low %v447, %v447
      %v452 = vcombine.low %v448, %v448
      %453 = vrot.lane.b32.xlu0 %v451, 26
      %v454 = vpop.permute.xlu0 %453
      %455 = vrot.lane.b32.xlu0 %v447, 26
      %v456 = vpop.permute.xlu0 %455
      %457 = vrot.lane.b32.xlu0 %v452, 26
      %v458 = vpop.permute.xlu0 %457
      %vm459 = vcmask 211968
      %v460 = vsel %vm459, %v454, %v456
      %v461 = vsel %vm459, %v456, %v458
      %465 = vst [vmem:[#allocation2 + $0x78] sm:$0xf0] %v460
      %466 = vst [vmem:[#allocation2 + $0x80] sm:$0xf0] %v461
      %467 = vst.msk [vmem:[#allocation2 + $0x88] sm:$0xf0] %vm261, %v458
      %v468 = vld [vmem:[%s223] sm:$0xff]
      %v469 = vld [vmem:[%s223 + $0x8] sm:$0xff]
      %v472 = vcombine.high %v468, %v468
      %v473 = vcombine.high %v469, %v469
      %474 = vrot.lane.b32.xlu0 %v468, 18
      %v475 = vpop.permute.xlu0 %474
      %476 = vrot.lane.b32.xlu0 %v472, 18
      %v477 = vpop.permute.xlu0 %476
      %478 = vrot.lane.b32.xlu0 %v469, 18
      %v479 = vpop.permute.xlu0 %478
      %480 = vrot.lane.b32.xlu0 %v473, 18
      %v481 = vpop.permute.xlu0 %480
      %vm482 = vcmask 146432
      %v483 = vsel %vm482, %v475, %v477
      %v484 = vsel %vm482, %v477, %v479
      %v485 = vsel %vm482, %v479, %v481
      %489 = vst [vmem:[#allocation2 + $0x90] sm:$0xf] %v483
      %490 = vst [vmem:[#allocation2 + $0x98] sm:$0xf] %v484
      %491 = vst.msk [vmem:[#allocation2 + $0xa0] sm:$0xf] %vm239, %v485
      %v492 = vld [vmem:[%s223] sm:$0xff]
      %v493 = vld [vmem:[%s223 + $0x8] sm:$0xff]
      %v496 = vcombine.low %v492, %v492
      %v497 = vcombine.low %v493, %v493
      %498 = vrot.lane.b32.xlu0 %v496, 17
      %v499 = vpop.permute.xlu0 %498
      %500 = vrot.lane.b32.xlu0 %v492, 17
      %v501 = vpop.permute.xlu0 %500
      %502 = vrot.lane.b32.xlu0 %v497, 17
      %v503 = vpop.permute.xlu0 %502
      %504 = vrot.lane.b32.xlu0 %v493, 17
      %v505 = vpop.permute.xlu0 %504
      %vm506 = vcmask 138240
      %v507 = vsel %vm506, %v499, %v501
      %v508 = vsel %vm506, %v501, %v503
      %v509 = vsel %vm506, %v503, %v505
      %513 = vst [vmem:[#allocation2 + $0x90] sm:$0xf0] %v507
      %514 = vst [vmem:[#allocation2 + $0x98] sm:$0xf0] %v508
      %515 = vst.msk [vmem:[#allocation2 + $0xa0] sm:$0xf0] %vm261, %v509
      %v516 = vld [vmem:[%s223] sm:$0xff]
      %v517 = vld [vmem:[%s223 + $0x8] sm:$0xff]
      %v520 = vcombine.high %v516, %v516
      %v521 = vcombine.high %v517, %v517
      %522 = vrot.lane.b32.xlu0 %v516, 16
      %v523 = vpop.permute.xlu0 %522
      %524 = vrot.lane.b32.xlu0 %v520, 16
      %v525 = vpop.permute.xlu0 %524
      %526 = vrot.lane.b32.xlu0 %v517, 16
      %v527 = vpop.permute.xlu0 %526
      %528 = vrot.lane.b32.xlu0 %v521, 16
      %v529 = vpop.permute.xlu0 %528
      %vm530 = vcmask 130048
      %v531 = vsel %vm530, %v523, %v525
      %v532 = vsel %vm530, %v525, %v527
      %v533 = vsel %vm530, %v527, %v529
      %537 = vst [vmem:[#allocation2 + $0xa8] sm:$0xf] %v531
      %538 = vst [vmem:[#allocation2 + $0xb0] sm:$0xf] %v532
      %539 = vst.msk [vmem:[#allocation2 + $0xb8] sm:$0xf] %vm239, %v533
      %v540 = vld [vmem:[%s223] sm:$0xff]
      %v541 = vld [vmem:[%s223 + $0x8] sm:$0xff]
      %v544 = vcombine.low %v540, %v540
      %v545 = vcombine.low %v541, %v541
      %546 = vrot.lane.b32.xlu0 %v544, 8
      %v547 = vpop.permute.xlu0 %546
      %548 = vrot.lane.b32.xlu0 %v540, 8
      %v549 = vpop.permute.xlu0 %548
      %550 = vrot.lane.b32.xlu0 %v545, 8
      %v551 = vpop.permute.xlu0 %550
      %552 = vrot.lane.b32.xlu0 %v541, 8
      %v553 = vpop.permute.xlu0 %552
      %vm554 = vcmask 64512
      %v555 = vsel %vm554, %v547, %v549
      %v556 = vsel %vm554, %v549, %v551
      %v557 = vsel %vm554, %v551, %v553
      %561 = vst [vmem:[#allocation2 + $0xa8] sm:$0xf0] %v555
      %562 = vst [vmem:[#allocation2 + $0xb0] sm:$0xf0] %v556
      %563 = vst.msk [vmem:[#allocation2 + $0xb8] sm:$0xf0] %vm261, %v557
      %v564 = vld [vmem:[%s223] sm:$0xff]
      %v565 = vld [vmem:[%s223 + $0x8] sm:$0xff]
      %v568 = vcombine.high %v564, %v564
      %v569 = vcombine.high %v565, %v565
      %570 = vrot.lane.b32.xlu0 %v564, 7
      %v571 = vpop.permute.xlu0 %570
      %572 = vrot.lane.b32.xlu0 %v568, 7
      %v573 = vpop.permute.xlu0 %572
      %574 = vrot.lane.b32.xlu0 %v565, 7
      %v575 = vpop.permute.xlu0 %574
      %576 = vrot.lane.b32.xlu0 %v569, 7
      %v577 = vpop.permute.xlu0 %576
      %vm578 = vcmask 56320
      %v579 = vsel %vm578, %v571, %v573
      %v580 = vsel %vm578, %v573, %v575
      %v581 = vsel %vm578, %v575, %v577
      %585 = vst [vmem:[#allocation2 + $0xc0] sm:$0xf] %v579
      %586 = vst [vmem:[#allocation2 + $0xc8] sm:$0xf] %v580
      %587 = vst.msk [vmem:[#allocation2 + $0xd0] sm:$0xf] %vm239, %v581
      %v588 = vld [vmem:[%s223] sm:$0xff]
      %v589 = vld [vmem:[%s223 + $0x8] sm:$0xff]
      %v592 = vcombine.low %v588, %v588
      %v593 = vcombine.low %v589, %v589
      %594 = vrot.lane.b32.xlu0 %v592, 6
      %v595 = vpop.permute.xlu0 %594
      %596 = vrot.lane.b32.xlu0 %v588, 6
      %v597 = vpop.permute.xlu0 %596
      %598 = vrot.lane.b32.xlu0 %v593, 6
      %v599 = vpop.permute.xlu0 %598
      %600 = vrot.lane.b32.xlu0 %v589, 6
      %v601 = vpop.permute.xlu0 %600
      %vm602 = vcmask 48128
      %v603 = vsel %vm602, %v595, %v597
      %v604 = vsel %vm602, %v597, %v599
      %v605 = vsel %vm602, %v599, %v601
      %609 = vst [vmem:[#allocation2 + $0xc0] sm:$0xf0] %v603
      %610 = vst [vmem:[#allocation2 + $0xc8] sm:$0xf0] %v604
      %611 = vst.msk [vmem:[#allocation2 + $0xd0] sm:$0xf0] %vm261, %v605
      %v612 = vld [vmem:[%s223 + $0x4] sm:$0xff]
      %v613 = vld [vmem:[%s223 + $0xc] sm:$0xf]
      %v616 = vcombine.high %v612, %v612
      %617 = vrot.lane.b32.xlu0 %v612, 56
      %v618 = vpop.permute.xlu0 %617
      %619 = vrot.lane.b32.xlu0 %v616, 56
      %v620 = vpop.permute.xlu0 %619
      %621 = vrot.lane.b32.xlu0 %v613, 56
      %v622 = vpop.permute.xlu0 %621
      %vm623 = vcmask 457728
      %v624 = vsel %vm623, %v618, %v620
      %v625 = vsel %vm623, %v620, %v622
      %629 = vst [vmem:[#allocation2 + $0xd8] sm:$0xf] %v624
      %630 = vst [vmem:[#allocation2 + $0xe0] sm:$0xf] %v625
      %631 = vst.msk [vmem:[#allocation2 + $0xe8] sm:$0xf] %vm239, %v622
      %v632 = vld [vmem:[%s223 + $0x4] sm:$0xff]
      %v633 = vld [vmem:[%s223 + $0xc] sm:$0xf]
      %v636 = vcombine.low %v632, %v632
      %v637 = vcombine.low %v633, %v633
      %638 = vrot.lane.b32.xlu0 %v636, 55
      %v639 = vpop.permute.xlu0 %638
      %640 = vrot.lane.b32.xlu0 %v632, 55
      %v641 = vpop.permute.xlu0 %640
      %642 = vrot.lane.b32.xlu0 %v637, 55
      %v643 = vpop.permute.xlu0 %642
      %vm644 = vcmask 449536
      %v645 = vsel %vm644, %v639, %v641
      %v646 = vsel %vm644, %v641, %v643
      %650 = vst [vmem:[#allocation2 + $0xd8] sm:$0xf0] %v645
      %651 = vst [vmem:[#allocation2 + $0xe0] sm:$0xf0] %v646
      %652 = vst.msk [vmem:[#allocation2 + $0xe8] sm:$0xf0] %vm261, %v643
      %v653 = vld [vmem:[%s223 + $0x4] sm:$0xff]
      %v654 = vld [vmem:[%s223 + $0xc] sm:$0xf]
      %v657 = vcombine.high %v653, %v653
      %658 = vrot.lane.b32.xlu0 %v653, 54
      %v659 = vpop.permute.xlu0 %658
      %660 = vrot.lane.b32.xlu0 %v657, 54
      %v661 = vpop.permute.xlu0 %660
      %662 = vrot.lane.b32.xlu0 %v654, 54
      %v663 = vpop.permute.xlu0 %662
      %vm664 = vcmask 441344
      %v665 = vsel %vm664, %v659, %v661
      %v666 = vsel %vm664, %v661, %v663
      %670 = vst [vmem:[#allocation2 + $0xf0] sm:$0xf] %v665
      %671 = vst [vmem:[#allocation2 + $0xf8] sm:$0xf] %v666
      %672 = vst.msk [vmem:[#allocation2 + $0x100] sm:$0xf] %vm239, %v663
      %v673 = vld [vmem:[%s223 + $0x4] sm:$0xff]
      %v674 = vld [vmem:[%s223 + $0xc] sm:$0xf]
      %v677 = vcombine.low %v673, %v673
      %v678 = vcombine.low %v674, %v674
      %679 = vrot.lane.b32.xlu0 %v677, 46
      %v680 = vpop.permute.xlu0 %679
      %681 = vrot.lane.b32.xlu0 %v673, 46
      %v682 = vpop.permute.xlu0 %681
      %683 = vrot.lane.b32.xlu0 %v678, 46
      %v684 = vpop.permute.xlu0 %683
      %vm685 = vcmask 375808
      %v686 = vsel %vm685, %v680, %v682
      %v687 = vsel %vm685, %v682, %v684
      %691 = vst [vmem:[#allocation2 + $0xf0] sm:$0xf0] %v686
      %692 = vst [vmem:[#allocation2 + $0xf8] sm:$0xf0] %v687
      %693 = vst.msk [vmem:[#allocation2 + $0x100] sm:$0xf0] %vm261, %v684
      %v694 = vld [vmem:[%s223 + $0x4] sm:$0xff]
      %v695 = vld [vmem:[%s223 + $0xc] sm:$0xf]
      %v698 = vcombine.high %v694, %v694
      %699 = vrot.lane.b32.xlu0 %v694, 45
      %v700 = vpop.permute.xlu0 %699
      %701 = vrot.lane.b32.xlu0 %v698, 45
      %v702 = vpop.permute.xlu0 %701
      %703 = vrot.lane.b32.xlu0 %v695, 45
      %v704 = vpop.permute.xlu0 %703
      %vm705 = vcmask 367616
      %v706 = vsel %vm705, %v700, %v702
      %v707 = vsel %vm705, %v702, %v704
      %711 = vst [vmem:[#allocation2 + $0x108] sm:$0xf] %v706
      %712 = vst [vmem:[#allocation2 + $0x110] sm:$0xf] %v707
      %713 = vst.msk [vmem:[#allocation2 + $0x118] sm:$0xf] %vm239, %v704
      %v714 = vld [vmem:[%s223 + $0x4] sm:$0xff]
      %v715 = vld [vmem:[%s223 + $0xc] sm:$0xf]
      %v718 = vcombine.low %v714, %v714
      %v719 = vcombine.low %v715, %v715
      %720 = vrot.lane.b32.xlu0 %v718, 44
      %v721 = vpop.permute.xlu0 %720
      %722 = vrot.lane.b32.xlu0 %v714, 44
      %v723 = vpop.permute.xlu0 %722
      %724 = vrot.lane.b32.xlu0 %v719, 44
      %v725 = vpop.permute.xlu0 %724
      %vm726 = vcmask 359424
      %v727 = vsel %vm726, %v721, %v723
      %v728 = vsel %vm726, %v723, %v725
      %732 = vst [vmem:[#allocation2 + $0x108] sm:$0xf0] %v727
      %733 = vst [vmem:[#allocation2 + $0x110] sm:$0xf0] %v728
      %734 = vst.msk [vmem:[#allocation2 + $0x118] sm:$0xf0] %vm261, %v725
      %v735 = vld [vmem:[%s223 + $0x4] sm:$0xff]
      %v736 = vld [vmem:[%s223 + $0xc] sm:$0xf]
      %v739 = vcombine.high %v735, %v735
      %740 = vrot.lane.b32.xlu0 %v735, 36
      %v741 = vpop.permute.xlu0 %740
      %742 = vrot.lane.b32.xlu0 %v739, 36
      %v743 = vpop.permute.xlu0 %742
      %744 = vrot.lane.b32.xlu0 %v736, 36
      %v745 = vpop.permute.xlu0 %744
      %vm746 = vcmask 293888
      %v747 = vsel %vm746, %v741, %v743
      %v748 = vsel %vm746, %v743, %v745
      %752 = vst [vmem:[#allocation2 + $0x120] sm:$0xf] %v747
      %753 = vst [vmem:[#allocation2 + $0x128] sm:$0xf] %v748
      %754 = vst.msk [vmem:[#allocation2 + $0x130] sm:$0xf] %vm239, %v745
      %v755 = vld [vmem:[%s223 + $0x4] sm:$0xff]
      %v756 = vld [vmem:[%s223 + $0xc] sm:$0xf]
      %v759 = vcombine.low %v755, %v755
      %v760 = vcombine.low %v756, %v756
      %761 = vrot.lane.b32.xlu0 %v759, 35
      %v762 = vpop.permute.xlu0 %761
      %763 = vrot.lane.b32.xlu0 %v755, 35
      %v764 = vpop.permute.xlu0 %763
      %765 = vrot.lane.b32.xlu0 %v760, 35
      %v766 = vpop.permute.xlu0 %765
      %vm767 = vcmask 285696
      %v768 = vsel %vm767, %v762, %v764
      %v769 = vsel %vm767, %v764, %v766
      %773 = vst [vmem:[#allocation2 + $0x120] sm:$0xf0] %v768
      %774 = vst [vmem:[#allocation2 + $0x128] sm:$0xf0] %v769
      %775 = vst.msk [vmem:[#allocation2 + $0x130] sm:$0xf0] %vm261, %v766
      %v776 = vld [vmem:[%s223 + $0x4] sm:$0xff]
      %v777 = vld [vmem:[%s223 + $0xc] sm:$0xf]
      %v780 = vcombine.high %v776, %v776
      %781 = vrot.lane.b32.xlu0 %v776, 34
      %v782 = vpop.permute.xlu0 %781
      %783 = vrot.lane.b32.xlu0 %v780, 34
      %v784 = vpop.permute.xlu0 %783
      %785 = vrot.lane.b32.xlu0 %v777, 34
      %v786 = vpop.permute.xlu0 %785
      %vm787 = vcmask 277504
      %v788 = vsel %vm787, %v782, %v784
      %v789 = vsel %vm787, %v784, %v786
      %793 = vst [vmem:[#allocation2 + $0x138] sm:$0xf] %v788
      %794 = vst [vmem:[#allocation2 + $0x140] sm:$0xf] %v789
      %795 = vst.msk [vmem:[#allocation2 + $0x148] sm:$0xf] %vm239, %v786
      %v796 = vld [vmem:[%s1] sm:$0xff]
      %v797 = vld [vmem:[#allocation2] sm:$0xff]
      %v798 = vld [vmem:[#allocation2 + $0x8] sm:$0xff]
      %v799 = vld [vmem:[#allocation2 + $0x10] sm:$0xff]
      %v800 = vld [vmem:[#allocation2 + $0x18] sm:$0xff]
      %v801 = vld [vmem:[#allocation2 + $0x20] sm:$0xff]
      %v802 = vld [vmem:[#allocation2 + $0x28] sm:$0xff]
      %v803 = vld [vmem:[#allocation2 + $0x30] sm:$0xff]
      %v804 = vld [vmem:[#allocation2 + $0x38] sm:$0xff]
      %v805 = vld [vmem:[#allocation2 + $0x40] sm:$0xff]
      %v806 = vld [vmem:[#allocation2 + $0x48] sm:$0xff]
      %v807 = vld [vmem:[#allocation2 + $0x50] sm:$0xff]
      %v808 = vld [vmem:[#allocation2 + $0x58] sm:$0xff]
      %v809 = vld [vmem:[#allocation2 + $0x60] sm:$0xff]
      %v810 = vld [vmem:[#allocation2 + $0x68] sm:$0xff]
      %v811 = vld [vmem:[#allocation2 + $0x70] sm:$0xff]
      %v812 = vld [vmem:[#allocation2 + $0x78] sm:$0xff]
      %v813 = vld [vmem:[#allocation2 + $0x80] sm:$0xff]
      %v814 = vld [vmem:[#allocation2 + $0x88] sm:$0xff]
      %v815 = vld [vmem:[#allocation2 + $0x90] sm:$0xff]
      %v816 = vld [vmem:[#allocation2 + $0x98] sm:$0xff]
      %v817 = vld [vmem:[#allocation2 + $0xa0] sm:$0xff]
      %v818 = vld [vmem:[#allocation2 + $0xa8] sm:$0xff]
      %v819 = vld [vmem:[#allocation2 + $0xb0] sm:$0xff]
      %v820 = vld [vmem:[#allocation2 + $0xb8] sm:$0xff]
      %v821 = vld [vmem:[#allocation2 + $0xc0] sm:$0xff]
      %v822 = vld [vmem:[#allocation2 + $0xc8] sm:$0xff]
      %v823 = vld [vmem:[#allocation2 + $0xd0] sm:$0xff]
      %v824 = vld [vmem:[#allocation2 + $0xd8] sm:$0xff]
      %v825 = vld [vmem:[#allocation2 + $0xe0] sm:$0xff]
      %v826 = vld [vmem:[#allocation2 + $0xe8] sm:$0xff]
      %v827 = vld [vmem:[#allocation2 + $0xf0] sm:$0xff]
      %v828 = vld [vmem:[#allocation2 + $0xf8] sm:$0xff]
      %v829 = vld [vmem:[#allocation2 + $0x100] sm:$0xff]
      %v830 = vld [vmem:[#allocation2 + $0x108] sm:$0xff]
      %v831 = vld [vmem:[#allocation2 + $0x110] sm:$0xff]
      %v832 = vld [vmem:[#allocation2 + $0x118] sm:$0xff]
      %v833 = vld [vmem:[#allocation2 + $0x120] sm:$0xff]
      %v834 = vld [vmem:[#allocation2 + $0x128] sm:$0xff]
      %v835 = vld [vmem:[#allocation2 + $0x130] sm:$0xff]
      %v836 = vld [vmem:[#allocation2 + $0x138] sm:$0xf]
      %v837 = vld [vmem:[#allocation2 + $0x140] sm:$0xf]
      %v838 = vld [vmem:[#allocation2 + $0x148] sm:$0xf]
      %v840 = vsel %vm356, %v796, 0
      %vm842 = vcmask 1043456
      %v844 = vsel %vm842, %v836, 0
      %v847 = vsel %vm842, %v837, 0
      %v850 = vsel %vm842, %v838, 0
      %852 = vmatprep.subr.mxu0 0.0
      %853 = vmatpush1.msra.mxu0 0.0
      %854 = vmatprep.subr.mxu0 0.0
      %855 = vmatpush1.msra.mxu0 0.0
      %856 = vmatprep.subr.mxu0 %v847
      %857 = vmatpush1.msra.mxu0 %v844
      %858 = vmatprep.subr.mxu0 %v834
      %859 = vmatpush1.msra.mxu0 %v833
      %860 = vmatprep.subr.mxu0 %v831
      %861 = vmatpush1.msra.mxu0 %v830
      %862 = vmatprep.subr.mxu0 %v828
      %863 = vmatpush1.msra.mxu0 %v827
      %864 = vmatprep.subr.mxu0 %v825
      %865 = vmatpush1.msra.mxu0 %v824
      %866 = vmatprep.subr.mxu0 %v822
      %867 = vmatpush1.msra.mxu0 %v821
      %868 = vmatprep.subr.mxu0 %v819
      %869 = vmatpush1.msra.mxu0 %v818
      %870 = vmatprep.subr.mxu0 %v816
      %871 = vmatpush1.msra.mxu0 %v815
      %872 = vmatprep.subr.mxu0 %v813
      %873 = vmatpush1.msra.mxu0 %v812
      %874 = vmatprep.subr.mxu0 %v810
      %875 = vmatpush1.msra.mxu0 %v809
      %876 = vmatprep.subr.mxu0 %v807
      %877 = vmatpush1.msra.mxu0 %v806
      %878 = vmatprep.subr.mxu0 %v804
      %879 = vmatpush1.msra.mxu0 %v803
      %880 = vmatprep.subr.mxu0 %v801
      %881 = vmatpush1.msra.mxu0 %v800
      %882 = vmatprep.subr.mxu0 %v798
      %883 = vmatpush1.msra.mxu0 %v797
      %884 = vmatprep.subr.mxu0 0.0
      %885 = vmatpush2.msra.mxu0 0.0
      %886 = vmatprep.subr.mxu0 0.0
      %887 = vmatpush2.msra.mxu0 0.0
      %888 = vmatprep.subr.mxu0 0.0
      %889 = vmatpush2.msra.mxu0 0.0
      %890 = vmatprep.subr.mxu0 0.0
      %891 = vmatpush2.msra.mxu0 0.0
      %892 = vmatprep.subr.mxu0 0.0
      %893 = vmatpush2.msra.mxu0 0.0
      %894 = vmatprep.subr.mxu0 0.0
      %895 = vmatpush2.msra.mxu0 0.0
      %896 = vmatprep.subr.mxu0 0.0
      %897 = vmatpush2.msra.mxu0 0.0
      %898 = vmatprep.subr.mxu0 0.0
      %899 = vmatpush2.msra.mxu0 0.0
      %900 = vmatprep.subr.mxu0 0.0
      %901 = vmatpush2.msra.mxu0 0.0
      %902 = vmatprep.subr.mxu0 0.0
      %903 = vmatpush2.msra.mxu0 0.0
      %904 = vmatprep.subr.mxu0 0.0
      %905 = vmatpush2.msra.mxu0 0.0
      %906 = vmatprep.subr.mxu0 0.0
      %907 = vmatpush2.msra.mxu0 0.0
      %908 = vmatprep.subr.mxu0 0.0
      %909 = vmatpush2.msra.mxu0 0.0
      %910 = vmatprep.subr.mxu0 0.0
      %911 = vmatpush2.msra.mxu0 0.0
      %912 = vmatprep.subr.mxu0 0.0
      %913 = vmatpush2.msra.mxu0 0.0
      %914 = vmatprep.subr.mxu0 0.0
      %915 = vmatpush2.msra.mxu0 0.0
      %916 = vmatprep.mubr.f32.mxu0 0.0
      %917 = vmatmul.mubr.f32.gmra.mxu0 %v840
      %v918 = vpop.f32.mrf.mxu0
      %v919 = vadd.f32 0.0, %v918
      %v920 = vpop.f32.mrf.mxu0
      %v921 = vadd.f32 0.0, %v920
      %922 = vdwg.mxu0
      %923 = vmatprep.subr.mxu0 0.0
      %924 = vmatpush1.msra.mxu0 0.0
      %925 = vmatprep.subr.mxu0 0.0
      %926 = vmatpush1.msra.mxu0 0.0
      %927 = vmatprep.subr.mxu0 0.0
      %928 = vmatpush1.msra.mxu0 %v850
      %929 = vmatprep.subr.mxu0 0.0
      %930 = vmatpush1.msra.mxu0 %v835
      %931 = vmatprep.subr.mxu0 0.0
      %932 = vmatpush1.msra.mxu0 %v832
      %933 = vmatprep.subr.mxu0 0.0
      %934 = vmatpush1.msra.mxu0 %v829
      %935 = vmatprep.subr.mxu0 0.0
      %936 = vmatpush1.msra.mxu0 %v826
      %937 = vmatprep.subr.mxu0 0.0
      %938 = vmatpush1.msra.mxu0 %v823
      %939 = vmatprep.subr.mxu0 0.0
      %940 = vmatpush1.msra.mxu0 %v820
      %941 = vmatprep.subr.mxu0 0.0
      %942 = vmatpush1.msra.mxu0 %v817
      %943 = vmatprep.subr.mxu0 0.0
      %944 = vmatpush1.msra.mxu0 %v814
      %945 = vmatprep.subr.mxu0 0.0
      %946 = vmatpush1.msra.mxu0 %v811
      %947 = vmatprep.subr.mxu0 0.0
      %948 = vmatpush1.msra.mxu0 %v808
      %949 = vmatprep.subr.mxu0 0.0
      %950 = vmatpush1.msra.mxu0 %v805
      %951 = vmatprep.subr.mxu0 0.0
      %952 = vmatpush1.msra.mxu0 %v802
      %953 = vmatprep.subr.mxu0 0.0
      %954 = vmatpush1.msra.mxu0 %v799
      %955 = vmatprep.subr.mxu0 0.0
      %956 = vmatpush2.msra.mxu0 0.0
      %957 = vmatprep.subr.mxu0 0.0
      %958 = vmatpush2.msra.mxu0 0.0
      %959 = vmatprep.subr.mxu0 0.0
      %960 = vmatpush2.msra.mxu0 0.0
      %961 = vmatprep.subr.mxu0 0.0
      %962 = vmatpush2.msra.mxu0 0.0
      %963 = vmatprep.subr.mxu0 0.0
      %964 = vmatpush2.msra.mxu0 0.0
      %965 = vmatprep.subr.mxu0 0.0
      %966 = vmatpush2.msra.mxu0 0.0
      %967 = vmatprep.subr.mxu0 0.0
      %968 = vmatpush2.msra.mxu0 0.0
      %969 = vmatprep.subr.mxu0 0.0
      %970 = vmatpush2.msra.mxu0 0.0
      %971 = vmatprep.subr.mxu0 0.0
      %972 = vmatpush2.msra.mxu0 0.0
      %973 = vmatprep.subr.mxu0 0.0
      %974 = vmatpush2.msra.mxu0 0.0
      %975 = vmatprep.subr.mxu0 0.0
      %976 = vmatpush2.msra.mxu0 0.0
      %977 = vmatprep.subr.mxu0 0.0
      %978 = vmatpush2.msra.mxu0 0.0
      %979 = vmatprep.subr.mxu0 0.0
      %980 = vmatpush2.msra.mxu0 0.0
      %981 = vmatprep.subr.mxu0 0.0
      %982 = vmatpush2.msra.mxu0 0.0
      %983 = vmatprep.subr.mxu0 0.0
      %984 = vmatpush2.msra.mxu0 0.0
      %985 = vmatprep.subr.mxu0 0.0
      %986 = vmatpush2.msra.mxu0 0.0
      %987 = vmatprep.mubr.f32.mxu0 0.0
      %988 = vmatmul.mubr.f32.gmra.mxu0 %v840
      %v989 = vpop.f32.mrf.mxu0
      %v990 = vadd.f32 0.0, %v989
      %v991 = vpop.f32.mrf.mxu0
      %992 = vdwg.mxu0
      %v993 = vld [vmem:[%s2] sm:$0xff]
      %995 = vset.pattern.permute.xlu0 0
      %996 = vperm.xlu0 %995, %v993
      %v997 = vpop.permute.xlu0 %996
      %v999 = vmul.f32 %v919, %v997
      %v1000 = vmul.f32 %v921, %v997
      %v1001 = vmul.f32 %v990, %v997
      %v1002 = vld [vmem:[%s3] sm:$0xff]
      %1004 = vset.pattern.permute.xlu0 0
      %1005 = vperm.xlu0 %1004, %v1002
      %v1006 = vpop.permute.xlu0 %1005
      %v1008 = vadd.f32 %v999, %v1006
      %v1009 = vadd.f32 %v1000, %v1006
      %v1010 = vadd.f32 %v1001, %v1006
      %vm1011 = vcmp.gt.f32.partialorder %v1008, 0.0
      %vm1012 = vcmp.gt.f32.partialorder %v1009, 0.0
      %vm1013 = vcmp.gt.f32.partialorder %v1010, 0.0
      %v1014 = vmin.f32 %v1008, 0.0
      %v1015 = vmin.f32 %v1009, 0.0
      %v1016 = vmin.f32 %v1010, 0.0
      %v1017 = vmul.f32 %v1014, 1.442695
      %v1018 = vpow.pop %v1017
      %v1019 = vmul.f32 %v1015, 1.442695
      %v1020 = vpow.pop %v1019
      %v1021 = vmul.f32 %v1016, 1.442695
      %v1022 = vpow.pop %v1021
      %v1023 = vsub.f32 %v1018, 1.0
      %v1024 = vsub.f32 %v1020, 1.0
      %v1025 = vsub.f32 %v1022, 1.0
      %v1026 = vsel %vm1011, %v1008, %v1023
      %v1027 = vsel %vm1012, %v1009, %v1024
      %v1028 = vsel %vm1013, %v1010, %v1025
      %1032 = vrot.lane.b32.xlu0 %v1026, 127
      %v1033 = vpop.permute.xlu0 %1032
      %1034 = vrot.lane.b32.xlu0 %v1027, 127
      %v1035 = vpop.permute.xlu0 %1034
      %1036 = vrot.lane.b32.xlu0 %v1028, 127
      %v1037 = vpop.permute.xlu0 %1036
      %v1038 = vsel %vm253, %v1033, %v1035
      %v1039 = vsel %vm253, %v1035, %v1037
      %v1043 = vmax.f32 %v1026, %v1038
      %v1044 = vmax.f32 %v1027, %v1039
      %v1045 = vmax.f32 %v1028, %v1037
      %1046 = vrot.lane.b32.xlu0 %v1026, 126
      %v1047 = vpop.permute.xlu0 %1046
      %1048 = vrot.lane.b32.xlu0 %v1027, 126
      %v1049 = vpop.permute.xlu0 %1048
      %1050 = vrot.lane.b32.xlu0 %v1028, 126
      %v1051 = vpop.permute.xlu0 %1050
      %v1052 = vsel %vm274, %v1047, %v1049
      %v1053 = vsel %vm274, %v1049, %v1051
      %v1057 = vmax.f32 %v1043, %v1052
      %v1058 = vmax.f32 %v1044, %v1053
      %v1059 = vmax.f32 %v1045, %v1051
      %1063 = vrot.lane.b32.xlu0 %v1057, 118
      %v1064 = vpop.permute.xlu0 %1063
      %1065 = vrot.lane.b32.xlu0 %v1058, 118
      %v1066 = vpop.permute.xlu0 %1065
      %1067 = vrot.lane.b32.xlu0 %v1059, 118
      %v1068 = vpop.permute.xlu0 %1067
      %v1069 = vsel %vm295, %v1064, %v1066
      %v1070 = vsel %vm295, %v1066, %v1068
      %v1073 = vmax.f32 %v1057, %v1069
      %v1074 = vmax.f32 %v1058, %v1070
      %1075 = vrot.lane.b32.xlu0 %v1057, 108
      %v1076 = vpop.permute.xlu0 %1075
      %1077 = vrot.lane.b32.xlu0 %v1058, 108
      %v1078 = vpop.permute.xlu0 %1077
      %1079 = vrot.lane.b32.xlu0 %v1059, 108
      %v1080 = vpop.permute.xlu0 %1079
      %v1081 = vsel %vm356, %v1076, %v1078
      %v1082 = vsel %vm356, %v1078, %v1080
      %v1085 = vmax.f32 %v1073, %v1081
      %v1086 = vmax.f32 %v1074, %v1082
      %1089 = vrot.lane.b32.xlu0 %v1085, 28
      %v1090 = vpop.permute.xlu0 %1089
      %1091 = vrot.lane.b32.xlu0 %v1086, 28
      %v1092 = vpop.permute.xlu0 %1091
      %v1093 = vsel %vm418, %v1090, %v1092
      %v1095 = vmax.f32 %v1085, %v1093
      %1096 = vrot.lane.b32.xlu0 %v1086, 56
      %v1097 = vpop.permute.xlu0 %1096
      %v1099 = vmax.f32 %v1095, %v1097
      %1100 = vst.msk [vmem:[%s231] sm:$0xff] %vm623, %v1099
      %p1101 = scmp.lt.s32.totalorder %s19, 1
      %s1102 = scalar_select %p1101, %s19, 1
      %p1103 = scmp.lt.s32.totalorder %s20, 2
      %s1104 = scalar_select %p1103, %s20, 2
      %s1105 = smul.addr %s1102, 3
      %s1106 = sadd.s32 %s1104, %s1105
      %s1107 = smul.addr %s1106, 8
      %s1108 = scalar_lea.vmem %s4, %s1107
      // Predicated region
      $region37: #{conv_block_forward.1} parent=35 // pred_check
        %p1109 = pneg %p138
      $region38: #{conv_block_forward.1} parent=35 // pred_check_branch
        %1111 = sbr.rel (%p1109) target = $region40
      $region39: #{conv_block_forward.1} parent=35 // pred_region
        _
      $region40: #{conv_block_forward.1} parent=35 // pred_fallthru
        _
    $region36: #{conv_block_forward.1} parent=5 // pred_fallthru
      _
    %p1112 = scmp.le.s32.totalorder 2, %s10
    // Predicated region
    $region41: #{conv_block_forward.1} parent=5 // pred_check
      %p1113 = pneg %p1112
    $region42: #{conv_block_forward.1} parent=5 // pred_check_branch
      %1115 = sbr.rel (%p1113) target = $region44
    $region43: #{conv_block_forward.1} parent=5 // pred_region
      %s1116 = ssub.s32 %s10, 2
      // Predicated region
      $region45: #{conv_block_forward.1} parent=43 // pred_check
        %p1117 = pneg %p144
      $region46: #{conv_block_forward.1} parent=43 // pred_check_branch
        %1119 = sbr.rel (%p1117) target = $region48
      $region47: #{conv_block_forward.1} parent=43 // pred_region
        %p1120 = scmp.lt.s32.totalorder %s21, 1
        %s1121 = scalar_select %p1120, %s21, 1
        %p1122 = scmp.lt.s32.totalorder %s22, 2
        %s1123 = scalar_select %p1122, %s22, 2
        %s1124 = smul.addr %s1121, 3
        %s1125 = sadd.s32 %s1123, %s1124
        %s1126 = smul.addr %s1125, 8
        %s1127 = scalar_lea.vmem %s4, %s1126
      $region48: #{conv_block_forward.1} parent=43 // pred_fallthru
        _
    $region44: #{conv_block_forward.1} parent=5 // pred_fallthru
      _
  $region6: #{conv_block_forward.1} parent=0 // loop_footer
    %s14 = sadd.s32 1, %s10
  $region7: #{conv_block_forward.1} parent=0 // loop_footer_branch
    %9 = sbr.rel target = $region3
  $region8: #{conv_block_forward.1} parent=0 // loop_exit
    _

</llo_original>
